<compile_context>
chip_gen: v5e
topology: v5e:2x2
jax: 0.10.0
libtpu: 0.0.40
codegen_flags: <defaults>
</compile_context>

<pallas_src>
import jax
import jax.numpy as jnp
from jax.experimental import pallas as pl
from jax.experimental.pallas import tpu as pltpu

_INV_SQRT2 = 0.7071067811865476


def _gelu_exact(x):
    # matches torch.nn.functional.gelu default (erf-based, not tanh approx)
    return 0.5 * x * (1.0 + jax.lax.erf(x * _INV_SQRT2))


# ---------------------------------------------------------------------------
# Kernel: 5 matmuls on a (tb, d*c) hidden state, all weights VMEM-resident.
# ---------------------------------------------------------------------------
def fcn_kernel(x_ref, wl_ref, cb_ref, m_ref, b_ref, wout_ref, bout_ref, out_ref):
    # lift_c + lift_d folded into one (in_dim, d*c) weight + bias row
    h = jnp.dot(x_ref[...], wl_ref[...],
                preferred_element_type=jnp.float32) + cb_ref[...]
    # three mixing blocks: each is a single (d*c, d*c) matmul (x1 + x2 + x3 folded)
    for k in range(3):
        h = jnp.dot(h, m_ref[k], preferred_element_type=jnp.float32) + b_ref[k]
        if k < 2:
            h = _gelu_exact(h)
    # layer4_c + layer4_d folded into one (d*c, out_pad) weight + bias row
    out_ref[...] = (jnp.dot(h, wout_ref[...],
                            preferred_element_type=jnp.float32) + bout_ref[...])


# ---------------------------------------------------------------------------
# One-time weight folding (hoisted out of the forward call; cache the result).
# ---------------------------------------------------------------------------
def prepare_fcn_params(p, lane=128):
    c = p["lift_c_w"].shape[0]
    d, in_dim = p["lift_d_w"].shape
    out_dim = p["l4_d_w"].shape[0]
    out_pad = max(lane, ((out_dim + lane - 1) // lane) * lane)   # lane-dense output

    wlc = p["lift_c_w"][:, 0]                    # (c,)
    blc = p["lift_c_b"]                          # (c,)
    Wld, bld = p["lift_d_w"], p["lift_d_b"]      # (d, in_dim), (d,)

    # H0[n, x*c+i] = (x @ Wld^T)[n, x] * wlc[i] + rowsum(Wld)[x]*blc[i] + bld[x]
    WL = (Wld.T[:, :, None] * wlc[None, None, :]).reshape(in_dim, d * c)
    CB = (jnp.sum(Wld, axis=1)[:, None] * blc[None, :]
          + bld[:, None]).reshape(1, d * c)

    eye_d = jnp.eye(d, dtype=jnp.float32)
    eye_c = jnp.eye(c, dtype=jnp.float32)
    Ms, Bs = [], []
    for k in (1, 2, 3):
        Wc, bc = p[f"l{k}_c_w"], p[f"l{k}_c_b"]          # (c,c), (c,)
        Wd, bd = p[f"l{k}_d_w"], p[f"l{k}_d_b"]          # (d,d), (d,)
        W = p[f"w{k}"]                                   # (c_in, c_out, d)
        # per-d combined channel weight: Wcomb[x, i, o] = Wc^T[i,o] + W[i,o,x]
        Wcomb = Wc.T[None, :, :] + jnp.transpose(W, (2, 0, 1))      # (d, c, c)
        # block-diagonal over the d-axis: rows y*c+i, cols x*c+o, block iff x==y
        M_bd = jnp.einsum("yx,xio->yixo", eye_d, Wcomb).reshape(d * c, d * c)
        # layer_d contribution: M[y*c+i, x*c+o] += Wd[x,y] * delta(i,o)
        M_k = M_bd + jnp.kron(Wd.T, eye_c)
        B_k = (bd[:, None] + bc[None, :]).reshape(1, d * c)
        Ms.append(M_k)
        Bs.append(B_k)
    M = jnp.stack(Ms)                                    # (3, d*c, d*c)
    B = jnp.stack(Bs)                                    # (3, 1, d*c)

    w4c, b4c = p["l4_c_w"][0], p["l4_c_b"][0]            # (c,), scalar
    W4d, b4d = p["l4_d_w"], p["l4_d_b"]                  # (out_dim, d), (out_dim,)
    WOUT = jnp.einsum("i,ox->xio", w4c, W4d).reshape(d * c, out_dim)
    BOUT = (b4c * jnp.sum(W4d, axis=1) + b4d)[None, :]   # (1, out_dim)
    # zero-pad to a lane-dense (multiple-of-128) output width
    WOUT = jnp.pad(WOUT, ((0, 0), (0, out_pad - out_dim)))
    BOUT = jnp.pad(BOUT, ((0, 0), (0, out_pad - out_dim)))

    return dict(WL=WL, CB=CB, M=M, B=B, WOUT=WOUT, BOUT=BOUT,
                dims=(in_dim, d, c, out_dim, out_pad))


def _full_spec(a):
    nd = a.ndim
    return pl.BlockSpec(a.shape, lambda i, _nd=nd: (0,) * _nd)


def _choose_tb(b, tb_max=512):
    """Pick a batch tile: big enough to amortize the weight stream over the MXU
    M dimension, multiple of 8 (sublane), capped for VMEM, and split into >= 2
    grid steps so v7x's 2 TensorCores both get work."""
    b_r = ((b + 7) // 8) * 8
    if b_r <= 8:
        return 8
    tb = min(tb_max, b_r)
    if tb >= b_r:                        # whole batch would be one grid step
        tb = ((b_r // 2 + 7) // 8) * 8   # split into two steps for v7x megacore
    return max(tb, 8)


def fcn_forward_pallas(x, prep, tb=None):
    """x: (batch, in_dim) float32. prep: output of prepare_fcn_params."""
    in_dim, d, c, out_dim, out_pad = prep["dims"]
    dc = d * c
    b = x.shape[0]
    if tb is None:
        tb = _choose_tb(b)
    grid = (pl.cdiv(b, tb),)             # partial last block handled by Pallas

    weights = (prep["WL"], prep["CB"], prep["M"], prep["B"],
               prep["WOUT"], prep["BOUT"])
    weight_bytes = sum(int(w.size) * w.dtype.itemsize for w in weights)
    cost = pl.CostEstimate(
        flops=int(2 * b * dc * (3 * dc + in_dim + out_pad)),
        transcendentals=int(2 * b * dc),
        bytes_accessed=int(weight_bytes + b * (in_dim + out_pad) * 4),
    )

    out = pl.pallas_call(
        fcn_kernel,
        out_shape=jax.ShapeDtypeStruct((b, out_pad), jnp.float32),
        grid=grid,
        in_specs=[pl.BlockSpec((tb, in_dim), lambda i: (i, 0))]
                 + [_full_spec(w) for w in weights],
        out_specs=pl.BlockSpec((tb, out_pad), lambda i: (i, 0)),
        compiler_params=pltpu.CompilerParams(
            dimension_semantics=("parallel",)),
        cost_estimate=cost,
    )(x, *weights)
    return out[:, :out_dim]


# ---------------------------------------------------------------------------
# Pure-JAX reference mirroring the PyTorch forward exactly.
# ---------------------------------------------------------------------------
def fcn_forward_ref(x, p):
    h = x[:, :, None]                                              # (b, in_dim, 1)
    h = h @ p["lift_c_w"].T + p["lift_c_b"]                        # (b, in_dim, c)
    h = jnp.transpose(h, (0, 2, 1))                                # (b, c, in_dim)
    h = h @ p["lift_d_w"].T + p["lift_d_b"]                        # (b, c, d)
    h = jnp.transpose(h, (0, 2, 1))                                # (b, d, c)
    for k in (1, 2, 3):
        x1 = h @ p[f"l{k}_c_w"].T + p[f"l{k}_c_b"]
        x2 = jnp.einsum("bxi,iox->bxo", h, p[f"w{k}"])
        x3 = jnp.transpose(h, (0, 2, 1)) @ p[f"l{k}_d_w"].T + p[f"l{k}_d_b"]
        x3 = jnp.transpose(x3, (0, 2, 1))
        h = x1 + x2 + x3
        if k < 3:
            h = _gelu_exact(h)
    h = h @ p["l4_c_w"].T + p["l4_c_b"]                            # (b, d, 1)
    h = jnp.transpose(h, (0, 2, 1))                                # (b, 1, d)
    h = h @ p["l4_d_w"].T + p["l4_d_b"]                            # (b, 1, out)
    return h[:, 0, :]


def init_params(key, in_dim, d_width, c_width, out_dim):
    keys = iter(jax.random.split(key, 32))

    def linear(out_f, in_f):
        bound = 1.0 / jnp.sqrt(jnp.float32(in_f))
        w = jax.random.uniform(next(keys), (out_f, in_f), jnp.float32, -bound, bound)
        b = jax.random.uniform(next(keys), (out_f,), jnp.float32, -bound, bound)
        return w, b

    p = {}
    p["lift_c_w"], p["lift_c_b"] = linear(c_width, 1)
    p["lift_d_w"], p["lift_d_b"] = linear(d_width, in_dim)
    for k in (1, 2, 3):
        p[f"l{k}_c_w"], p[f"l{k}_c_b"] = linear(c_width, c_width)
        p[f"l{k}_d_w"], p[f"l{k}_d_b"] = linear(d_width, d_width)
    p["l4_c_w"], p["l4_c_b"] = linear(1, c_width)
    p["l4_d_w"], p["l4_d_b"] = linear(out_dim, d_width)

    scale = 1.0 / (c_width * c_width)
    for k in (1, 2, 3):
        p[f"w{k}"] = scale * jax.random.uniform(
            next(keys), (c_width, c_width, d_width), jnp.float32)
    return p


if __name__ == "__main__":
    batch, in_dim, d_width, c_width, out_dim = 2, 16, 32, 16, 8

    key = jax.random.PRNGKey(0)
    k_params, k_x, k_x2 = jax.random.split(key, 3)
    params = init_params(k_params, in_dim, d_width, c_width, out_dim)

    # one-time weight folding (hoisted out of the per-call forward path)
    prep = jax.tree_util.tree_map(jax.block_until_ready, prepare_fcn_params(params))

    # small-batch check (matches the module's tiny example shapes)
    x = jax.random.normal(k_x, (batch, in_dim), jnp.float32)
    out = jax.block_until_ready(fcn_forward_pallas(x, prep))
    ref = jax.block_until_ready(fcn_forward_ref(x, params))
    assert out.shape == (batch, out_dim)
    assert jnp.allclose(out, ref, rtol=1e-4, atol=1e-4), \
        float(jnp.max(jnp.abs(out - ref)))

    # multi-grid-step + partial-last-block check (no wrapper-side padding)
    batch2 = 37
    x2 = jax.random.normal(k_x2, (batch2, in_dim), jnp.float32)
    out2 = jax.block_until_ready(fcn_forward_pallas(x2, prep))
    ref2 = jax.block_until_ready(fcn_forward_ref(x2, params))
    assert out2.shape == (batch2, out_dim)
    assert jnp.allclose(out2, ref2, rtol=1e-4, atol=1e-4), \
        float(jnp.max(jnp.abs(out2 - ref2)))

    print("KERNEL_OK")
</pallas_src>

<mosaic_0001>
module attributes {stable_mosaic.version = 11 : i64} {
  func.func @fcn_kernel(%arg0: i32, %arg1: memref<8x16xf32, #tpu.memory_space<vmem>>, %arg2: memref<16x512xf32, #tpu.memory_space<vmem>>, %arg3: memref<1x512xf32, #tpu.memory_space<vmem>>, %arg4: memref<3x512x512xf32, #tpu.memory_space<vmem>>, %arg5: memref<3x1x512xf32, #tpu.memory_space<vmem>>, %arg6: memref<512x128xf32, #tpu.memory_space<vmem>>, %arg7: memref<1x128xf32, #tpu.memory_space<vmem>>, %arg8: memref<8x128xf32, #tpu.memory_space<vmem>>) attributes {dimension_semantics = [#tpu.dimension_semantics<parallel>], iteration_bounds = array<i64: 1>, scalar_prefetch = 0 : i64, scratch_operands = 0 : i64, tpu.core_type = #tpu.core_type<tc>, window_params = [{transform_indices = @transform_0, window_bounds = array<i64: 8, 16>}, {pipeline_mode = #tpu.pipeline_mode<synchronous>, transform_indices = @transform_1, window_bounds = array<i64: 16, 512>}, {pipeline_mode = #tpu.pipeline_mode<synchronous>, transform_indices = @transform_2, window_bounds = array<i64: 1, 512>}, {pipeline_mode = #tpu.pipeline_mode<synchronous>, transform_indices = @transform_3, window_bounds = array<i64: 3, 512, 512>}, {pipeline_mode = #tpu.pipeline_mode<synchronous>, transform_indices = @transform_4, window_bounds = array<i64: 3, 1, 512>}, {pipeline_mode = #tpu.pipeline_mode<synchronous>, transform_indices = @transform_5, window_bounds = array<i64: 512, 128>}, {pipeline_mode = #tpu.pipeline_mode<synchronous>, transform_indices = @transform_6, window_bounds = array<i64: 1, 128>}, {transform_indices = @transform_7, window_bounds = array<i64: 8, 128>}]} {
    %c0 = arith.constant 0 : index
    %c0_0 = arith.constant 0 : index
    %0 = vector.load %arg1[%c0, %c0_0] : memref<8x16xf32, #tpu.memory_space<vmem>>, vector<8x16xf32>
    %c0_1 = arith.constant 0 : index
    %c0_2 = arith.constant 0 : index
    %1 = vector.load %arg2[%c0_1, %c0_2] : memref<16x512xf32, #tpu.memory_space<vmem>>, vector<16x512xf32>
    %cst = arith.constant dense<0.000000e+00> : vector<8x512xf32>
    %2 = tpu.matmul %0, %1, %cst {dimension_numbers = #tpu.dot_dimension_numbers<[1], [0], [0], [1], [0, 0, 1, 1], [], []>} : vector<8x16xf32>, vector<16x512xf32>, vector<8x512xf32> -> vector<8x512xf32>
    %c0_3 = arith.constant 0 : index
    %c0_4 = arith.constant 0 : index
    %3 = vector.load %arg3[%c0_3, %c0_4] : memref<1x512xf32, #tpu.memory_space<vmem>>, vector<1x512xf32>
    %4 = vector.broadcast %3 : vector<1x512xf32> to vector<8x512xf32>
    %5 = arith.addf %2, %4 : vector<8x512xf32>
    %c0_5 = arith.constant 0 : index
    %c0_6 = arith.constant 0 : index
    %c0_7 = arith.constant 0 : index
    %6 = vector.load %arg4[%c0_5, %c0_6, %c0_7] : memref<3x512x512xf32, #tpu.memory_space<vmem>>, vector<1x512x512xf32>
    %7 = vector.shape_cast %6 : vector<1x512x512xf32> to vector<512x512xf32>
    %cst_8 = arith.constant dense<0.000000e+00> : vector<8x512xf32>
    %8 = tpu.matmul %5, %7, %cst_8 {dimension_numbers = #tpu.dot_dimension_numbers<[1], [0], [0], [1], [0, 0, 1, 1], [], []>} : vector<8x512xf32>, vector<512x512xf32>, vector<8x512xf32> -> vector<8x512xf32>
    %c0_9 = arith.constant 0 : index
    %c0_10 = arith.constant 0 : index
    %c0_11 = arith.constant 0 : index
    %9 = vector.load %arg5[%c0_9, %c0_10, %c0_11] : memref<3x1x512xf32, #tpu.memory_space<vmem>>, vector<1x1x512xf32>
    %10 = vector.shape_cast %9 : vector<1x1x512xf32> to vector<1x512xf32>
    %11 = vector.broadcast %10 : vector<1x512xf32> to vector<8x512xf32>
    %12 = arith.addf %8, %11 : vector<8x512xf32>
    %cst_12 = arith.constant 5.000000e-01 : f32
    %13 = vector.broadcast %cst_12 : f32 to vector<8x512xf32>
    %14 = arith.mulf %13, %12 : vector<8x512xf32>
    %cst_13 = arith.constant 0.707106769 : f32
    %15 = vector.broadcast %cst_13 : f32 to vector<8x512xf32>
    %16 = arith.mulf %12, %15 : vector<8x512xf32>
    %17 = math.erf %16 : vector<8x512xf32>
    %cst_14 = arith.constant 1.000000e+00 : f32
    %18 = vector.broadcast %cst_14 : f32 to vector<8x512xf32>
    %19 = arith.addf %18, %17 : vector<8x512xf32>
    %20 = arith.mulf %14, %19 : vector<8x512xf32>
    %c1 = arith.constant 1 : index
    %c0_15 = arith.constant 0 : index
    %c0_16 = arith.constant 0 : index
    %21 = vector.load %arg4[%c1, %c0_15, %c0_16] : memref<3x512x512xf32, #tpu.memory_space<vmem>>, vector<1x512x512xf32>
    %22 = vector.shape_cast %21 : vector<1x512x512xf32> to vector<512x512xf32>
    %cst_17 = arith.constant dense<0.000000e+00> : vector<8x512xf32>
    %23 = tpu.matmul %20, %22, %cst_17 {dimension_numbers = #tpu.dot_dimension_numbers<[1], [0], [0], [1], [0, 0, 1, 1], [], []>} : vector<8x512xf32>, vector<512x512xf32>, vector<8x512xf32> -> vector<8x512xf32>
    %c1_18 = arith.constant 1 : index
    %c0_19 = arith.constant 0 : index
    %c0_20 = arith.constant 0 : index
    %24 = vector.load %arg5[%c1_18, %c0_19, %c0_20] : memref<3x1x512xf32, #tpu.memory_space<vmem>>, vector<1x1x512xf32>
    %25 = vector.shape_cast %24 : vector<1x1x512xf32> to vector<1x512xf32>
    %26 = vector.broadcast %25 : vector<1x512xf32> to vector<8x512xf32>
    %27 = arith.addf %23, %26 : vector<8x512xf32>
    %cst_21 = arith.constant 5.000000e-01 : f32
    %28 = vector.broadcast %cst_21 : f32 to vector<8x512xf32>
    %29 = arith.mulf %28, %27 : vector<8x512xf32>
    %cst_22 = arith.constant 0.707106769 : f32
    %30 = vector.broadcast %cst_22 : f32 to vector<8x512xf32>
    %31 = arith.mulf %27, %30 : vector<8x512xf32>
    %32 = math.erf %31 : vector<8x512xf32>
    %cst_23 = arith.constant 1.000000e+00 : f32
    %33 = vector.broadcast %cst_23 : f32 to vector<8x512xf32>
    %34 = arith.addf %33, %32 : vector<8x512xf32>
    %35 = arith.mulf %29, %34 : vector<8x512xf32>
    %c2 = arith.constant 2 : index
    %c0_24 = arith.constant 0 : index
    %c0_25 = arith.constant 0 : index
    %36 = vector.load %arg4[%c2, %c0_24, %c0_25] : memref<3x512x512xf32, #tpu.memory_space<vmem>>, vector<1x512x512xf32>
    %37 = vector.shape_cast %36 : vector<1x512x512xf32> to vector<512x512xf32>
    %cst_26 = arith.constant dense<0.000000e+00> : vector<8x512xf32>
    %38 = tpu.matmul %35, %37, %cst_26 {dimension_numbers = #tpu.dot_dimension_numbers<[1], [0], [0], [1], [0, 0, 1, 1], [], []>} : vector<8x512xf32>, vector<512x512xf32>, vector<8x512xf32> -> vector<8x512xf32>
    %c2_27 = arith.constant 2 : index
    %c0_28 = arith.constant 0 : index
    %c0_29 = arith.constant 0 : index
    %39 = vector.load %arg5[%c2_27, %c0_28, %c0_29] : memref<3x1x512xf32, #tpu.memory_space<vmem>>, vector<1x1x512xf32>
    %40 = vector.shape_cast %39 : vector<1x1x512xf32> to vector<1x512xf32>
    %41 = vector.broadcast %40 : vector<1x512xf32> to vector<8x512xf32>
    %42 = arith.addf %38, %41 : vector<8x512xf32>
    %c0_30 = arith.constant 0 : index
    %c0_31 = arith.constant 0 : index
    %43 = vector.load %arg6[%c0_30, %c0_31] : memref<512x128xf32, #tpu.memory_space<vmem>>, vector<512x128xf32>
    %cst_32 = arith.constant dense<0.000000e+00> : vector<8x128xf32>
    %44 = tpu.matmul %42, %43, %cst_32 {dimension_numbers = #tpu.dot_dimension_numbers<[1], [0], [0], [1], [0, 0, 1, 1], [], []>} : vector<8x512xf32>, vector<512x128xf32>, vector<8x128xf32> -> vector<8x128xf32>
    %c0_33 = arith.constant 0 : index
    %c0_34 = arith.constant 0 : index
    %45 = vector.load %arg7[%c0_33, %c0_34] : memref<1x128xf32, #tpu.memory_space<vmem>>, vector<1x128xf32>
    %46 = vector.broadcast %45 : vector<1x128xf32> to vector<8x128xf32>
    %47 = arith.addf %44, %46 : vector<8x128xf32>
    %c0_35 = arith.constant 0 : index
    %c0_36 = arith.constant 0 : index
    %48 = vector.load %arg8[%c0_35, %c0_36] : memref<8x128xf32, #tpu.memory_space<vmem>>, vector<8x128xf32>
    tpu.vector_store %arg8[%c0_35, %c0_36], %47 {strides = array<i32>} : memref<8x128xf32, #tpu.memory_space<vmem>>, vector<8x128xf32>,
    return
  }
  func.func @transform_0(%arg0: i32) -> (i32, i32) {
    %c0_i32 = arith.constant 0 : i32
    %c0_i32_0 = arith.constant 0 : i32
    return %arg0, %c0_i32 : i32, i32
  }
  func.func @transform_1(%arg0: i32) -> (i32, i32) {
    %c0_i32 = arith.constant 0 : i32
    %c0_i32_0 = arith.constant 0 : i32
    %c0_i32_1 = arith.constant 0 : i32
    return %c0_i32, %c0_i32_0 : i32, i32
  }
  func.func @transform_2(%arg0: i32) -> (i32, i32) {
    %c0_i32 = arith.constant 0 : i32
    %c0_i32_0 = arith.constant 0 : i32
    %c0_i32_1 = arith.constant 0 : i32
    return %c0_i32, %c0_i32_0 : i32, i32
  }
  func.func @transform_3(%arg0: i32) -> (i32, i32, i32) {
    %c0_i32 = arith.constant 0 : i32
    %c0_i32_0 = arith.constant 0 : i32
    %c0_i32_1 = arith.constant 0 : i32
    %c0_i32_2 = arith.constant 0 : i32
    return %c0_i32, %c0_i32_0, %c0_i32_1 : i32, i32, i32
  }
  func.func @transform_4(%arg0: i32) -> (i32, i32, i32) {
    %c0_i32 = arith.constant 0 : i32
    %c0_i32_0 = arith.constant 0 : i32
    %c0_i32_1 = arith.constant 0 : i32
    %c0_i32_2 = arith.constant 0 : i32
    return %c0_i32, %c0_i32_0, %c0_i32_1 : i32, i32, i32
  }
  func.func @transform_5(%arg0: i32) -> (i32, i32) {
    %c0_i32 = arith.constant 0 : i32
    %c0_i32_0 = arith.constant 0 : i32
    %c0_i32_1 = arith.constant 0 : i32
    return %c0_i32, %c0_i32_0 : i32, i32
  }
  func.func @transform_6(%arg0: i32) -> (i32, i32) {
    %c0_i32 = arith.constant 0 : i32
    %c0_i32_0 = arith.constant 0 : i32
    %c0_i32_1 = arith.constant 0 : i32
    return %c0_i32, %c0_i32_0 : i32, i32
  }
  func.func @transform_7(%arg0: i32) -> (i32, i32) {
    %c0_i32 = arith.constant 0 : i32
    %c0_i32_0 = arith.constant 0 : i32
    return %arg0, %c0_i32 : i32, i32
  }
}

</mosaic_0001>

<llo_original>
// kernel: tpu_custom_call.1
$region0: #{tpu_custom_call.1}
  #allocation0 [shape = 'u32[]', space=smem, size = 0x4, offset = 0x4, fixed_abs, tag = 'smem constant byte address 0x4 - core index']
  #allocation1 [shape = 'u32[72,128]{1,0:T(1,128)}', space=vmem, size = 0x9000, scoped, tag = 'internal scratch']
  %s0 = inlined_call_operand.hbm [shape: f32[2,16], index: 0, kind: input, shape index: {}]
  %s1 = inlined_call_operand.hbm [shape: f32[16,512], index: 1, kind: input, shape index: {}]
  %s2 = inlined_call_operand.hbm [shape: f32[1,512], index: 2, kind: input, shape index: {}]
  %s3 = inlined_call_operand.hbm [shape: f32[3,512,512], index: 3, kind: input, shape index: {}]
  %s4 = inlined_call_operand.hbm [shape: f32[3,1,512], index: 4, kind: input, shape index: {}]
  %s5 = inlined_call_operand.hbm [shape: f32[512,128], index: 5, kind: input, shape index: {}]
  %s6 = inlined_call_operand.hbm [shape: f32[1,128], index: 6, kind: input, shape index: {}]
  %s7 = inlined_call_operand.hbm [shape: f32[2,128], index: 7, kind: output, shape index: {}]
  %s8 = sld [smem:[#allocation0]]
  $region66: #{tpu_custom_call.1} parent=0
    _
  %s10 = ssub.s32 1, %s8
  %s11 = scalar_select 0, %s10, %s8
  $region1: #{tpu_custom_call.1} parent=0
    #allocation2 [shape = 'u8[4096]{0}', space=vmem, size = 0x1000, scoped, tag = 'input window, operand 0, single buffered']
    #allocation3 [shape = 's32[1]{0}', space=sflag, size = 0x4, scoped, tag = 'scoped memory for tpu_custom_call.1']
    #allocation4 [shape = 's32[1]{0}', space=sflag, size = 0x4, scoped, tag = 'scoped memory for tpu_custom_call.1']
    #allocation5 [shape = 'u8[32768]{0}', space=vmem, size = 0x8000, scoped, tag = 'input window, operand 1, single buffered']
    #allocation6 [shape = 's32[1]{0}', space=sflag, size = 0x4, scoped, tag = 'scoped memory for tpu_custom_call.1']
    #allocation7 [shape = 'u8[2048]{0}', space=vmem, size = 0x800, scoped, tag = 'input window, operand 2, single buffered']
    #allocation8 [shape = 'u8[3145728]{0}', space=vmem, size = 0x300000, scoped, tag = 'input window, operand 3, single buffered']
    #allocation9 [shape = 's32[1]{0}', space=sflag, size = 0x4, scoped, tag = 'scoped memory for tpu_custom_call.1']
    #allocation10 [shape = 'u8[6144]{0}', space=vmem, size = 0x1800, scoped, tag = 'input window, operand 4, single buffered']
    #allocation11 [shape = 'u8[262144]{0}', space=vmem, size = 0x40000, scoped, tag = 'input window, operand 5, single buffered']
    #allocation12 [shape = 's32[1]{0}', space=sflag, size = 0x4, scoped, tag = 'scoped memory for tpu_custom_call.1']
    #allocation13 [shape = 'u8[512]{0}', space=vmem, size = 0x400, scoped, tag = 'input window, operand 6, single buffered']
    #allocation14 [shape = 'u8[4096]{0}', space=vmem, size = 0x1000, scoped, tag = 'output window, operand 0, single buffered']
    %12 = vsyncpa [#allocation3], 0
    %13 = vsyncpa [#allocation6], 0
    %14 = vsyncpa [#allocation9], 0
    %15 = vsyncpa [#allocation12], 0
    %16 = vsyncpa [#allocation4], 0
    // Predicated region
    $region2: #{tpu_custom_call.1} parent=1 // pred_check
      _
    $region3: #{tpu_custom_call.1} parent=1 // pred_check_branch
      %18 = sbr.rel (0) target = $region5
    $region4: #{tpu_custom_call.1} parent=1 // pred_region
      %20 = vsyncadd [#allocation3], 96
      %s21 = sshll.u32 %s0, 4
      %s22 = int_to_ptr.hbm [resolvable:$true] %s21
      %s23 = sshll.u32 [#allocation2], 4
      %s24 = int_to_ptr.vmem [resolvable:$true] %s23
      %29 = dma.hbm_to_vmem [thread:$0]  %s22, 32, %s24, [#allocation3], 32, 32, 2
    $region5: #{tpu_custom_call.1} parent=1 // pred_fallthru
      _
    // Predicated region
    $region6: #{tpu_custom_call.1} parent=1 // pred_check
      _
    $region7: #{tpu_custom_call.1} parent=1 // pred_check_branch
      %31 = sbr.rel (0) target = $region9
    $region8: #{tpu_custom_call.1} parent=1 // pred_region
      %33 = vsyncadd [#allocation6], 0
      %s34 = sshll.u32 %s1, 4
      %s35 = int_to_ptr.hbm [resolvable:$true] %s34
      %s36 = sshll.u32 [#allocation5], 4
      %s37 = int_to_ptr.vmem [resolvable:$true] %s36
      %42 = dma.hbm_to_vmem [thread:$0]  %s35, 1024, %s37, [#allocation6], 512, 512, 32
    $region9: #{tpu_custom_call.1} parent=1 // pred_fallthru
      _
    // Predicated region
    $region10: #{tpu_custom_call.1} parent=1 // pred_check
      _
    $region11: #{tpu_custom_call.1} parent=1 // pred_check_branch
      %44 = sbr.rel (0) target = $region13
    $region12: #{tpu_custom_call.1} parent=1 // pred_region
      %46 = vsyncadd [#allocation6], 0
      %s48 = sshll.u32 %s2, 4
      %s49 = int_to_ptr.hbm [resolvable:$true] %s48
      %s50 = sshll.u32 [#allocation7], 4
      %s51 = int_to_ptr.vmem [resolvable:$true] %s50
      %53 = dma.hbm_to_vmem [thread:$0]  %s49, 64, %s51, [#allocation6]
    $region13: #{tpu_custom_call.1} parent=1 // pred_fallthru
      _
    // Predicated region
    $region14: #{tpu_custom_call.1} parent=1 // pred_check
      _
    $region15: #{tpu_custom_call.1} parent=1 // pred_check_branch
      %55 = sbr.rel (0) target = $region17
    $region16: #{tpu_custom_call.1} parent=1 // pred_region
      %57 = vsyncadd [#allocation9], 0
      %s58 = sshll.u32 %s3, 4
      %s59 = int_to_ptr.hbm [resolvable:$true] %s58
      %s60 = sshll.u32 [#allocation8], 4
      %s61 = int_to_ptr.vmem [resolvable:$true] %s60
      %66 = dma.hbm_to_vmem [thread:$0]  %s59, 98304, %s61, [#allocation9], 512, 512, 32
    $region17: #{tpu_custom_call.1} parent=1 // pred_fallthru
      _
    // Predicated region
    $region18: #{tpu_custom_call.1} parent=1 // pred_check
      _
    $region19: #{tpu_custom_call.1} parent=1 // pred_check_branch
      %68 = sbr.rel (0) target = $region21
    $region20: #{tpu_custom_call.1} parent=1 // pred_region
      %70 = vsyncadd [#allocation9], 0
      %s71 = sshll.u32 %s4, 4
      %s72 = int_to_ptr.hbm [resolvable:$true] %s71
      %s73 = sshll.u32 [#allocation10], 4
      %s74 = int_to_ptr.vmem [resolvable:$true] %s73
      %79 = dma.hbm_to_vmem [thread:$0]  %s72, 192, %s74, [#allocation9], 64, 64, 4
    $region21: #{tpu_custom_call.1} parent=1 // pred_fallthru
      _
    // Predicated region
    $region22: #{tpu_custom_call.1} parent=1 // pred_check
      _
    $region23: #{tpu_custom_call.1} parent=1 // pred_check_branch
      %81 = sbr.rel (0) target = $region25
    $region24: #{tpu_custom_call.1} parent=1 // pred_region
      %83 = vsyncadd [#allocation12], 0
      %s84 = sshll.u32 %s5, 4
      %s85 = int_to_ptr.hbm [resolvable:$true] %s84
      %s86 = sshll.u32 [#allocation11], 4
      %s87 = int_to_ptr.vmem [resolvable:$true] %s86
      %92 = dma.hbm_to_vmem [thread:$0]  %s85, 8192, %s87, [#allocation12], 128, 128, 8
    $region25: #{tpu_custom_call.1} parent=1 // pred_fallthru
      _
    // Predicated region
    $region26: #{tpu_custom_call.1} parent=1 // pred_check
      _
    $region27: #{tpu_custom_call.1} parent=1 // pred_check_branch
      %94 = sbr.rel (0) target = $region29
    $region28: #{tpu_custom_call.1} parent=1 // pred_region
      %96 = vsyncadd [#allocation12], 0
      %s98 = sshll.u32 %s6, 4
      %s99 = int_to_ptr.hbm [resolvable:$true] %s98
      %s100 = sshll.u32 [#allocation13], 4
      %s101 = int_to_ptr.vmem [resolvable:$true] %s100
      %103 = dma.hbm_to_vmem [thread:$0]  %s99, 16, %s101, [#allocation12]
    $region29: #{tpu_custom_call.1} parent=1 // pred_fallthru
      _
    // Predicated region
    $region30: #{tpu_custom_call.1} parent=1 // pred_check
      _
    $region31: #{tpu_custom_call.1} parent=1 // pred_check_branch
      %105 = sbr.rel (0) target = $region33
    $region32: #{tpu_custom_call.1} parent=1 // pred_region
      %107 = dma.done [#allocation3], 128
    $region33: #{tpu_custom_call.1} parent=1 // pred_fallthru
      _
    // Predicated region
    $region34: #{tpu_custom_call.1} parent=1 // pred_check
      _
    $region35: #{tpu_custom_call.1} parent=1 // pred_check_branch
      %109 = sbr.rel (0) target = $region37
    $region36: #{tpu_custom_call.1} parent=1 // pred_region
      %111 = dma.done [#allocation6], 1024
    $region37: #{tpu_custom_call.1} parent=1 // pred_fallthru
      _
    // Predicated region
    $region38: #{tpu_custom_call.1} parent=1 // pred_check
      _
    $region39: #{tpu_custom_call.1} parent=1 // pred_check_branch
      %113 = sbr.rel (0) target = $region41
    $region40: #{tpu_custom_call.1} parent=1 // pred_region
      %115 = dma.done [#allocation6], 64
    $region41: #{tpu_custom_call.1} parent=1 // pred_fallthru
      _
    // Predicated region
    $region42: #{tpu_custom_call.1} parent=1 // pred_check
      _
    $region43: #{tpu_custom_call.1} parent=1 // pred_check_branch
      %117 = sbr.rel (0) target = $region45
    $region44: #{tpu_custom_call.1} parent=1 // pred_region
      %119 = dma.done [#allocation9], 98304
    $region45: #{tpu_custom_call.1} parent=1 // pred_fallthru
      _
    // Predicated region
    $region46: #{tpu_custom_call.1} parent=1 // pred_check
      _
    $region47: #{tpu_custom_call.1} parent=1 // pred_check_branch
      %121 = sbr.rel (0) target = $region49
    $region48: #{tpu_custom_call.1} parent=1 // pred_region
      %123 = dma.done [#allocation9], 192
    $region49: #{tpu_custom_call.1} parent=1 // pred_fallthru
      _
    // Predicated region
    $region50: #{tpu_custom_call.1} parent=1 // pred_check
      _
    $region51: #{tpu_custom_call.1} parent=1 // pred_check_branch
      %125 = sbr.rel (0) target = $region53
    $region52: #{tpu_custom_call.1} parent=1 // pred_region
      %127 = dma.done [#allocation12], 8192
    $region53: #{tpu_custom_call.1} parent=1 // pred_fallthru
      _
    // Predicated region
    $region54: #{tpu_custom_call.1} parent=1 // pred_check
      _
    $region55: #{tpu_custom_call.1} parent=1 // pred_check_branch
      %129 = sbr.rel (0) target = $region57
    $region56: #{tpu_custom_call.1} parent=1 // pred_region
      %131 = dma.done [#allocation12], 16
    $region57: #{tpu_custom_call.1} parent=1 // pred_fallthru
      _
    %v132 = vld [vmem:[#allocation2] sm:$0xff]
    %v133 = vld [vmem:[#allocation5] sm:$0xff]
    %v134 = vld [vmem:[#allocation5 + $0x8] sm:$0xff]
    %v135 = vld [vmem:[#allocation5 + $0x10] sm:$0xff]
    %v136 = vld [vmem:[#allocation5 + $0x18] sm:$0xff]
    %v137 = vld [vmem:[#allocation5 + $0x20] sm:$0xff]
    %v138 = vld [vmem:[#allocation5 + $0x28] sm:$0xff]
    %v139 = vld [vmem:[#allocation5 + $0x30] sm:$0xff]
    %v140 = vld [vmem:[#allocation5 + $0x38] sm:$0xff]
    %v141 = vld [vmem:[#allocation7] sm:$0xf]
    %v143 = vperm.slane %v141, 0
    %v144 = vperm.slane %v141, 1
    %v145 = vperm.slane %v141, 2
    %v146 = vperm.slane %v141, 3
    %vm151 = vcmask 130048
    %v153 = vsel %vm151, %v132, 0
    %155 = vmatpush.msra.mxu0 0.0
    %156 = vmatpush.msra.mxu0 0.0
    %157 = vmatpush.msra.mxu0 0.0
    %158 = vmatpush.msra.mxu0 0.0
    %159 = vmatpush.msra.mxu0 0.0
    %160 = vmatpush.msra.mxu0 0.0
    %161 = vmatpush.msra.mxu0 0.0
    %162 = vmatpush.msra.mxu0 0.0
    %163 = vmatpush.msra.mxu0 0.0
    %164 = vmatpush.msra.mxu0 0.0
    %165 = vmatpush.msra.mxu0 0.0
    %166 = vmatpush.msra.mxu0 0.0
    %167 = vmatpush.msra.mxu0 0.0
    %168 = vmatpush.msra.mxu0 0.0
    %169 = vmatpush.msra.mxu0 %v137
    %170 = vmatpush.msra.mxu0 %v133
    %171 = vmatmul.f32.gmra.mxu0 %v153
    %v172 = vpop.f32.mrf.mxu0
    %v173 = vadd.f32 %v143, %v172
    %174 = vdwg.mxu0
    %175 = vmatpush.msra.mxu0 0.0
    %176 = vmatpush.msra.mxu0 0.0
    %177 = vmatpush.msra.mxu0 0.0
    %178 = vmatpush.msra.mxu0 0.0
    %179 = vmatpush.msra.mxu0 0.0
    %180 = vmatpush.msra.mxu0 0.0
    %181 = vmatpush.msra.mxu0 0.0
    %182 = vmatpush.msra.mxu0 0.0
    %183 = vmatpush.msra.mxu0 0.0
    %184 = vmatpush.msra.mxu0 0.0
    %185 = vmatpush.msra.mxu0 0.0
    %186 = vmatpush.msra.mxu0 0.0
    %187 = vmatpush.msra.mxu0 0.0
    %188 = vmatpush.msra.mxu0 0.0
    %189 = vmatpush.msra.mxu0 %v138
    %190 = vmatpush.msra.mxu0 %v134
    %191 = vmatmul.f32.gmra.mxu0 %v153
    %v192 = vpop.f32.mrf.mxu0
    %v193 = vadd.f32 %v144, %v192
    %194 = vdwg.mxu0
    %195 = vmatpush.msra.mxu0 0.0
    %196 = vmatpush.msra.mxu0 0.0
    %197 = vmatpush.msra.mxu0 0.0
    %198 = vmatpush.msra.mxu0 0.0
    %199 = vmatpush.msra.mxu0 0.0
    %200 = vmatpush.msra.mxu0 0.0
    %201 = vmatpush.msra.mxu0 0.0
    %202 = vmatpush.msra.mxu0 0.0
    %203 = vmatpush.msra.mxu0 0.0
    %204 = vmatpush.msra.mxu0 0.0
    %205 = vmatpush.msra.mxu0 0.0
    %206 = vmatpush.msra.mxu0 0.0
    %207 = vmatpush.msra.mxu0 0.0
    %208 = vmatpush.msra.mxu0 0.0
    %209 = vmatpush.msra.mxu0 %v139
    %210 = vmatpush.msra.mxu0 %v135
    %211 = vmatmul.f32.gmra.mxu0 %v153
    %v212 = vpop.f32.mrf.mxu0
    %v213 = vadd.f32 %v145, %v212
    %214 = vdwg.mxu0
    %215 = vmatpush.msra.mxu0 0.0
    %216 = vmatpush.msra.mxu0 0.0
    %217 = vmatpush.msra.mxu0 0.0
    %218 = vmatpush.msra.mxu0 0.0
    %219 = vmatpush.msra.mxu0 0.0
    %220 = vmatpush.msra.mxu0 0.0
    %221 = vmatpush.msra.mxu0 0.0
    %222 = vmatpush.msra.mxu0 0.0
    %223 = vmatpush.msra.mxu0 0.0
    %224 = vmatpush.msra.mxu0 0.0
    %225 = vmatpush.msra.mxu0 0.0
    %226 = vmatpush.msra.mxu0 0.0
    %227 = vmatpush.msra.mxu0 0.0
    %228 = vmatpush.msra.mxu0 0.0
    %229 = vmatpush.msra.mxu0 %v140
    %230 = vmatpush.msra.mxu0 %v136
    %231 = vmatmul.f32.gmra.mxu0 %v153
    %v232 = vpop.f32.mrf.mxu0
    %v233 = vadd.f32 %v146, %v232
    %234 = vdwg.mxu0
    %v235 = vld [vmem:[#allocation8] sm:$0xff]
    %v236 = vld [vmem:[#allocation8 + $0x8] sm:$0xff]
    %v237 = vld [vmem:[#allocation8 + $0x10] sm:$0xff]
    %v238 = vld [vmem:[#allocation8 + $0x18] sm:$0xff]
    %v239 = vld [vmem:[#allocation8 + $0x20] sm:$0xff]
    %v240 = vld [vmem:[#allocation8 + $0x28] sm:$0xff]
    %v241 = vld [vmem:[#allocation8 + $0x30] sm:$0xff]
    %v242 = vld [vmem:[#allocation8 + $0x38] sm:$0xff]
    %v243 = vld [vmem:[#allocation8 + $0x40] sm:$0xff]
    %v244 = vld [vmem:[#allocation8 + $0x48] sm:$0xff]
    %v245 = vld [vmem:[#allocation8 + $0x50] sm:$0xff]
    %v246 = vld [vmem:[#allocation8 + $0x58] sm:$0xff]
    %v247 = vld [vmem:[#allocation8 + $0x60] sm:$0xff]
    %v248 = vld [vmem:[#allocation8 + $0x68] sm:$0xff]
    %v249 = vld [vmem:[#allocation8 + $0x70] sm:$0xff]
    %v250 = vld [vmem:[#allocation8 + $0x78] sm:$0xff]
    %v251 = vld [vmem:[#allocation8 + $0x80] sm:$0xff]
    %v252 = vld [vmem:[#allocation8 + $0x88] sm:$0xff]
    %v253 = vld [vmem:[#allocation8 + $0x90] sm:$0xff]
    %v254 = vld [vmem:[#allocation8 + $0x98] sm:$0xff]
    %v255 = vld [vmem:[#allocation8 + $0xa0] sm:$0xff]
    %v256 = vld [vmem:[#allocation8 + $0xa8] sm:$0xff]
    %v257 = vld [vmem:[#allocation8 + $0xb0] sm:$0xff]
    %v258 = vld [vmem:[#allocation8 + $0xb8] sm:$0xff]
    %v259 = vld [vmem:[#allocation8 + $0xc0] sm:$0xff]
    %v260 = vld [vmem:[#allocation8 + $0xc8] sm:$0xff]
    %v261 = vld [vmem:[#allocation8 + $0xd0] sm:$0xff]
    %v262 = vld [vmem:[#allocation8 + $0xd8] sm:$0xff]
    %v263 = vld [vmem:[#allocation8 + $0xe0] sm:$0xff]
    %v264 = vld [vmem:[#allocation8 + $0xe8] sm:$0xff]
    %v265 = vld [vmem:[#allocation8 + $0xf0] sm:$0xff]
    %v266 = vld [vmem:[#allocation8 + $0xf8] sm:$0xff]
    %v267 = vld [vmem:[#allocation8 + $0x100] sm:$0xff]
    %v268 = vld [vmem:[#allocation8 + $0x108] sm:$0xff]
    %v269 = vld [vmem:[#allocation8 + $0x110] sm:$0xff]
    %v270 = vld [vmem:[#allocation8 + $0x118] sm:$0xff]
    %v271 = vld [vmem:[#allocation8 + $0x120] sm:$0xff]
    %v272 = vld [vmem:[#allocation8 + $0x128] sm:$0xff]
    %v273 = vld [vmem:[#allocation8 + $0x130] sm:$0xff]
    %v274 = vld [vmem:[#allocation8 + $0x138] sm:$0xff]
    %v275 = vld [vmem:[#allocation8 + $0x140] sm:$0xff]
    %v276 = vld [vmem:[#allocation8 + $0x148] sm:$0xff]
    %v277 = vld [vmem:[#allocation8 + $0x150] sm:$0xff]
    %v278 = vld [vmem:[#allocation8 + $0x158] sm:$0xff]
    %v279 = vld [vmem:[#allocation8 + $0x160] sm:$0xff]
    %v280 = vld [vmem:[#allocation8 + $0x168] sm:$0xff]
    %v281 = vld [vmem:[#allocation8 + $0x170] sm:$0xff]
    %v282 = vld [vmem:[#allocation8 + $0x178] sm:$0xff]
    %v283 = vld [vmem:[#allocation8 + $0x180] sm:$0xff]
    %v284 = vld [vmem:[#allocation8 + $0x188] sm:$0xff]
    %v285 = vld [vmem:[#allocation8 + $0x190] sm:$0xff]
    %v286 = vld [vmem:[#allocation8 + $0x198] sm:$0xff]
    %v287 = vld [vmem:[#allocation8 + $0x1a0] sm:$0xff]
    %v288 = vld [vmem:[#allocation8 + $0x1a8] sm:$0xff]
    %v289 = vld [vmem:[#allocation8 + $0x1b0] sm:$0xff]
    %v290 = vld [vmem:[#allocation8 + $0x1b8] sm:$0xff]
    %v291 = vld [vmem:[#allocation8 + $0x1c0] sm:$0xff]
    %v292 = vld [vmem:[#allocation8 + $0x1c8] sm:$0xff]
    %v293 = vld [vmem:[#allocation8 + $0x1d0] sm:$0xff]
    %v294 = vld [vmem:[#allocation8 + $0x1d8] sm:$0xff]
    %v295 = vld [vmem:[#allocation8 + $0x1e0] sm:$0xff]
    %v296 = vld [vmem:[#allocation8 + $0x1e8] sm:$0xff]
    %v297 = vld [vmem:[#allocation8 + $0x1f0] sm:$0xff]
    %v298 = vld [vmem:[#allocation8 + $0x1f8] sm:$0xff]
    %v299 = vld [vmem:[#allocation8 + $0x200] sm:$0xff]
    %v300 = vld [vmem:[#allocation8 + $0x208] sm:$0xff]
    %v301 = vld [vmem:[#allocation8 + $0x210] sm:$0xff]
    %v302 = vld [vmem:[#allocation8 + $0x218] sm:$0xff]
    %v303 = vld [vmem:[#allocation8 + $0x220] sm:$0xff]
    %v304 = vld [vmem:[#allocation8 + $0x228] sm:$0xff]
    %v305 = vld [vmem:[#allocation8 + $0x230] sm:$0xff]
    %v306 = vld [vmem:[#allocation8 + $0x238] sm:$0xff]
    %v307 = vld [vmem:[#allocation8 + $0x240] sm:$0xff]
    %v308 = vld [vmem:[#allocation8 + $0x248] sm:$0xff]
    %v309 = vld [vmem:[#allocation8 + $0x250] sm:$0xff]
    %v310 = vld [vmem:[#allocation8 + $0x258] sm:$0xff]
    %v311 = vld [vmem:[#allocation8 + $0x260] sm:$0xff]
    %v312 = vld [vmem:[#allocation8 + $0x268] sm:$0xff]
    %v313 = vld [vmem:[#allocation8 + $0x270] sm:$0xff]
    %v314 = vld [vmem:[#allocation8 + $0x278] sm:$0xff]
    %v315 = vld [vmem:[#allocation8 + $0x280] sm:$0xff]
    %v316 = vld [vmem:[#allocation8 + $0x288] sm:$0xff]
    %v317 = vld [vmem:[#allocation8 + $0x290] sm:$0xff]
    %v318 = vld [vmem:[#allocation8 + $0x298] sm:$0xff]
    %v319 = vld [vmem:[#allocation8 + $0x2a0] sm:$0xff]
    %v320 = vld [vmem:[#allocation8 + $0x2a8] sm:$0xff]
    %v321 = vld [vmem:[#allocation8 + $0x2b0] sm:$0xff]
    %v322 = vld [vmem:[#allocation8 + $0x2b8] sm:$0xff]
    %v323 = vld [vmem:[#allocation8 + $0x2c0] sm:$0xff]
    %v324 = vld [vmem:[#allocation8 + $0x2c8] sm:$0xff]
    %v325 = vld [vmem:[#allocation8 + $0x2d0] sm:$0xff]
    %v326 = vld [vmem:[#allocation8 + $0x2d8] sm:$0xff]
    %v327 = vld [vmem:[#allocation8 + $0x2e0] sm:$0xff]
    %v328 = vld [vmem:[#allocation8 + $0x2e8] sm:$0xff]
    %v329 = vld [vmem:[#allocation8 + $0x2f0] sm:$0xff]
    %v330 = vld [vmem:[#allocation8 + $0x2f8] sm:$0xff]
    %v331 = vld [vmem:[#allocation8 + $0x300] sm:$0xff]
    %v332 = vld [vmem:[#allocation8 + $0x308] sm:$0xff]
    %v333 = vld [vmem:[#allocation8 + $0x310] sm:$0xff]
    %v334 = vld [vmem:[#allocation8 + $0x318] sm:$0xff]
    %v335 = vld [vmem:[#allocation8 + $0x320] sm:$0xff]
    %v336 = vld [vmem:[#allocation8 + $0x328] sm:$0xff]
    %v337 = vld [vmem:[#allocation8 + $0x330] sm:$0xff]
    %v338 = vld [vmem:[#allocation8 + $0x338] sm:$0xff]
    %v339 = vld [vmem:[#allocation8 + $0x340] sm:$0xff]
    %v340 = vld [vmem:[#allocation8 + $0x348] sm:$0xff]
    %v341 = vld [vmem:[#allocation8 + $0x350] sm:$0xff]
    %v342 = vld [vmem:[#allocation8 + $0x358] sm:$0xff]
    %v343 = vld [vmem:[#allocation8 + $0x360] sm:$0xff]
    %v344 = vld [vmem:[#allocation8 + $0x368] sm:$0xff]
    %v345 = vld [vmem:[#allocation8 + $0x370] sm:$0xff]
    %v346 = vld [vmem:[#allocation8 + $0x378] sm:$0xff]
    %v347 = vld [vmem:[#allocation8 + $0x380] sm:$0xff]
    %v348 = vld [vmem:[#allocation8 + $0x388] sm:$0xff]
    %v349 = vld [vmem:[#allocation8 + $0x390] sm:$0xff]
    %v350 = vld [vmem:[#allocation8 + $0x398] sm:$0xff]
    %v351 = vld [vmem:[#allocation8 + $0x3a0] sm:$0xff]
    %v352 = vld [vmem:[#allocation8 + $0x3a8] sm:$0xff]
    %v353 = vld [vmem:[#allocation8 + $0x3b0] sm:$0xff]
    %v354 = vld [vmem:[#allocation8 + $0x3b8] sm:$0xff]
    %v355 = vld [vmem:[#allocation8 + $0x3c0] sm:$0xff]
    %v356 = vld [vmem:[#allocation8 + $0x3c8] sm:$0xff]
    %v357 = vld [vmem:[#allocation8 + $0x3d0] sm:$0xff]
    %v358 = vld [vmem:[#allocation8 + $0x3d8] sm:$0xff]
    %v359 = vld [vmem:[#allocation8 + $0x3e0] sm:$0xff]
    %v360 = vld [vmem:[#allocation8 + $0x3e8] sm:$0xff]
    %v361 = vld [vmem:[#allocation8 + $0x3f0] sm:$0xff]
    %v362 = vld [vmem:[#allocation8 + $0x3f8] sm:$0xff]
    %v363 = vld [vmem:[#allocation8 + $0x400] sm:$0xff]
    %v364 = vld [vmem:[#allocation8 + $0x408] sm:$0xff]
    %v365 = vld [vmem:[#allocation8 + $0x410] sm:$0xff]
    %v366 = vld [vmem:[#allocation8 + $0x418] sm:$0xff]
    %v367 = vld [vmem:[#allocation8 + $0x420] sm:$0xff]
    %v368 = vld [vmem:[#allocation8 + $0x428] sm:$0xff]
    %v369 = vld [vmem:[#allocation8 + $0x430] sm:$0xff]
    %v370 = vld [vmem:[#allocation8 + $0x438] sm:$0xff]
    %v371 = vld [vmem:[#allocation8 + $0x440] sm:$0xff]
    %v372 = vld [vmem:[#allocation8 + $0x448] sm:$0xff]
    %v373 = vld [vmem:[#allocation8 + $0x450] sm:$0xff]
    %v374 = vld [vmem:[#allocation8 + $0x458] sm:$0xff]
    %v375 = vld [vmem:[#allocation8 + $0x460] sm:$0xff]
    %v376 = vld [vmem:[#allocation8 + $0x468] sm:$0xff]
    %v377 = vld [vmem:[#allocation8 + $0x470] sm:$0xff]
    %v378 = vld [vmem:[#allocation8 + $0x478] sm:$0xff]
    %v379 = vld [vmem:[#allocation8 + $0x480] sm:$0xff]
    %v380 = vld [vmem:[#allocation8 + $0x488] sm:$0xff]
    %v381 = vld [vmem:[#allocation8 + $0x490] sm:$0xff]
    %v382 = vld [vmem:[#allocation8 + $0x498] sm:$0xff]
    %v383 = vld [vmem:[#allocation8 + $0x4a0] sm:$0xff]
    %v384 = vld [vmem:[#allocation8 + $0x4a8] sm:$0xff]
    %v385 = vld [vmem:[#allocation8 + $0x4b0] sm:$0xff]
    %v386 = vld [vmem:[#allocation8 + $0x4b8] sm:$0xff]
    %v387 = vld [vmem:[#allocation8 + $0x4c0] sm:$0xff]
    %v388 = vld [vmem:[#allocation8 + $0x4c8] sm:$0xff]
    %v389 = vld [vmem:[#allocation8 + $0x4d0] sm:$0xff]
    %v390 = vld [vmem:[#allocation8 + $0x4d8] sm:$0xff]
    %v391 = vld [vmem:[#allocation8 + $0x4e0] sm:$0xff]
    %v392 = vld [vmem:[#allocation8 + $0x4e8] sm:$0xff]
    %v393 = vld [vmem:[#allocation8 + $0x4f0] sm:$0xff]
    %v394 = vld [vmem:[#allocation8 + $0x4f8] sm:$0xff]
    %v395 = vld [vmem:[#allocation8 + $0x500] sm:$0xff]
    %v396 = vld [vmem:[#allocation8 + $0x508] sm:$0xff]
    %v397 = vld [vmem:[#allocation8 + $0x510] sm:$0xff]
    %v398 = vld [vmem:[#allocation8 + $0x518] sm:$0xff]
    %v399 = vld [vmem:[#allocation8 + $0x520] sm:$0xff]
    %v400 = vld [vmem:[#allocation8 + $0x528] sm:$0xff]
    %v401 = vld [vmem:[#allocation8 + $0x530] sm:$0xff]
    %v402 = vld [vmem:[#allocation8 + $0x538] sm:$0xff]
    %v403 = vld [vmem:[#allocation8 + $0x540] sm:$0xff]
    %v404 = vld [vmem:[#allocation8 + $0x548] sm:$0xff]
    %v405 = vld [vmem:[#allocation8 + $0x550] sm:$0xff]
    %v406 = vld [vmem:[#allocation8 + $0x558] sm:$0xff]
    %v407 = vld [vmem:[#allocation8 + $0x560] sm:$0xff]
    %v408 = vld [vmem:[#allocation8 + $0x568] sm:$0xff]
    %v409 = vld [vmem:[#allocation8 + $0x570] sm:$0xff]
    %v410 = vld [vmem:[#allocation8 + $0x578] sm:$0xff]
    %v411 = vld [vmem:[#allocation8 + $0x580] sm:$0xff]
    %v412 = vld [vmem:[#allocation8 + $0x588] sm:$0xff]
    %v413 = vld [vmem:[#allocation8 + $0x590] sm:$0xff]
    %v414 = vld [vmem:[#allocation8 + $0x598] sm:$0xff]
    %v415 = vld [vmem:[#allocation8 + $0x5a0] sm:$0xff]
    %v416 = vld [vmem:[#allocation8 + $0x5a8] sm:$0xff]
    %v417 = vld [vmem:[#allocation8 + $0x5b0] sm:$0xff]
    %v418 = vld [vmem:[#allocation8 + $0x5b8] sm:$0xff]
    %v419 = vld [vmem:[#allocation8 + $0x5c0] sm:$0xff]
    %v420 = vld [vmem:[#allocation8 + $0x5c8] sm:$0xff]
    %v421 = vld [vmem:[#allocation8 + $0x5d0] sm:$0xff]
    %v422 = vld [vmem:[#allocation8 + $0x5d8] sm:$0xff]
    %v423 = vld [vmem:[#allocation8 + $0x5e0] sm:$0xff]
    %v424 = vld [vmem:[#allocation8 + $0x5e8] sm:$0xff]
    %v425 = vld [vmem:[#allocation8 + $0x5f0] sm:$0xff]
    %v426 = vld [vmem:[#allocation8 + $0x5f8] sm:$0xff]
    %v427 = vld [vmem:[#allocation8 + $0x600] sm:$0xff]
    %v428 = vld [vmem:[#allocation8 + $0x608] sm:$0xff]
    %v429 = vld [vmem:[#allocation8 + $0x610] sm:$0xff]
    %v430 = vld [vmem:[#allocation8 + $0x618] sm:$0xff]
    %v431 = vld [vmem:[#allocation8 + $0x620] sm:$0xff]
    %v432 = vld [vmem:[#allocation8 + $0x628] sm:$0xff]
    %v433 = vld [vmem:[#allocation8 + $0x630] sm:$0xff]
    %v434 = vld [vmem:[#allocation8 + $0x638] sm:$0xff]
    %v435 = vld [vmem:[#allocation8 + $0x640] sm:$0xff]
    %v436 = vld [vmem:[#allocation8 + $0x648] sm:$0xff]
    %v437 = vld [vmem:[#allocation8 + $0x650] sm:$0xff]
    %v438 = vld [vmem:[#allocation8 + $0x658] sm:$0xff]
    %v439 = vld [vmem:[#allocation8 + $0x660] sm:$0xff]
    %v440 = vld [vmem:[#allocation8 + $0x668] sm:$0xff]
    %v441 = vld [vmem:[#allocation8 + $0x670] sm:$0xff]
    %v442 = vld [vmem:[#allocation8 + $0x678] sm:$0xff]
    %v443 = vld [vmem:[#allocation8 + $0x680] sm:$0xff]
    %v444 = vld [vmem:[#allocation8 + $0x688] sm:$0xff]
    %v445 = vld [vmem:[#allocation8 + $0x690] sm:$0xff]
    %v446 = vld [vmem:[#allocation8 + $0x698] sm:$0xff]
    %v447 = vld [vmem:[#allocation8 + $0x6a0] sm:$0xff]
    %v448 = vld [vmem:[#allocation8 + $0x6a8] sm:$0xff]
    %v449 = vld [vmem:[#allocation8 + $0x6b0] sm:$0xff]
    %v450 = vld [vmem:[#allocation8 + $0x6b8] sm:$0xff]
    %v451 = vld [vmem:[#allocation8 + $0x6c0] sm:$0xff]
    %v452 = vld [vmem:[#allocation8 + $0x6c8] sm:$0xff]
    %v453 = vld [vmem:[#allocation8 + $0x6d0] sm:$0xff]
    %v454 = vld [vmem:[#allocation8 + $0x6d8] sm:$0xff]
    %v455 = vld [vmem:[#allocation8 + $0x6e0] sm:$0xff]
    %v456 = vld [vmem:[#allocation8 + $0x6e8] sm:$0xff]
    %v457 = vld [vmem:[#allocation8 + $0x6f0] sm:$0xff]
    %v458 = vld [vmem:[#allocation8 + $0x6f8] sm:$0xff]
    %v459 = vld [vmem:[#allocation8 + $0x700] sm:$0xff]
    %v460 = vld [vmem:[#allocation8 + $0x708] sm:$0xff]
    %v461 = vld [vmem:[#allocation8 + $0x710] sm:$0xff]
    %v462 = vld [vmem:[#allocation8 + $0x718] sm:$0xff]
    %v463 = vld [vmem:[#allocation8 + $0x720] sm:$0xff]
    %v464 = vld [vmem:[#allocation8 + $0x728] sm:$0xff]
    %v465 = vld [vmem:[#allocation8 + $0x730] sm:$0xff]
    %v466 = vld [vmem:[#allocation8 + $0x738] sm:$0xff]
    %v467 = vld [vmem:[#allocation8 + $0x740] sm:$0xff]
    %v468 = vld [vmem:[#allocation8 + $0x748] sm:$0xff]
    %v469 = vld [vmem:[#allocation8 + $0x750] sm:$0xff]
    %v470 = vld [vmem:[#allocation8 + $0x758] sm:$0xff]
    %v471 = vld [vmem:[#allocation8 + $0x760] sm:$0xff]
    %v472 = vld [vmem:[#allocation8 + $0x768] sm:$0xff]
    %v473 = vld [vmem:[#allocation8 + $0x770] sm:$0xff]
    %v474 = vld [vmem:[#allocation8 + $0x778] sm:$0xff]
    %v475 = vld [vmem:[#allocation8 + $0x780] sm:$0xff]
    %v476 = vld [vmem:[#allocation8 + $0x788] sm:$0xff]
    %v477 = vld [vmem:[#allocation8 + $0x790] sm:$0xff]
    %v478 = vld [vmem:[#allocation8 + $0x798] sm:$0xff]
    %v479 = vld [vmem:[#allocation8 + $0x7a0] sm:$0xff]
    %v480 = vld [vmem:[#allocation8 + $0x7a8] sm:$0xff]
    %v481 = vld [vmem:[#allocation8 + $0x7b0] sm:$0xff]
    %v482 = vld [vmem:[#allocation8 + $0x7b8] sm:$0xff]
    %v483 = vld [vmem:[#allocation8 + $0x7c0] sm:$0xff]
    %v484 = vld [vmem:[#allocation8 + $0x7c8] sm:$0xff]
    %v485 = vld [vmem:[#allocation8 + $0x7d0] sm:$0xff]
    %v486 = vld [vmem:[#allocation8 + $0x7d8] sm:$0xff]
    %v487 = vld [vmem:[#allocation8 + $0x7e0] sm:$0xff]
    %v488 = vld [vmem:[#allocation8 + $0x7e8] sm:$0xff]
    %v489 = vld [vmem:[#allocation8 + $0x7f0] sm:$0xff]
    %v490 = vld [vmem:[#allocation8 + $0x7f8] sm:$0xff]
    %v491 = vld [vmem:[#allocation10] sm:$0xf]
    %v493 = vperm.slane %v491, 0
    %v494 = vperm.slane %v491, 1
    %v495 = vperm.slane %v491, 2
    %v496 = vperm.slane %v491, 3
    %501 = vmatpush.msra.mxu0 %v295
    %502 = vmatpush.msra.mxu0 %v291
    %503 = vmatpush.msra.mxu0 %v287
    %504 = vmatpush.msra.mxu0 %v283
    %505 = vmatpush.msra.mxu0 %v279
    %506 = vmatpush.msra.mxu0 %v275
    %507 = vmatpush.msra.mxu0 %v271
    %508 = vmatpush.msra.mxu0 %v267
    %509 = vmatpush.msra.mxu0 %v263
    %510 = vmatpush.msra.mxu0 %v259
    %511 = vmatpush.msra.mxu0 %v255
    %512 = vmatpush.msra.mxu0 %v251
    %513 = vmatpush.msra.mxu0 %v247
    %514 = vmatpush.msra.mxu0 %v243
    %515 = vmatpush.msra.mxu0 %v239
    %516 = vmatpush.msra.mxu0 %v235
    %517 = vmatmul.f32.gmra.mxu0 %v173
    %v518 = vpop.f32.mrf.mxu0
    %v519 = vadd.f32 %v493, %v518
    %520 = vdwg.mxu0
    %521 = vmatpush.msra.mxu0 %v359
    %522 = vmatpush.msra.mxu0 %v355
    %523 = vmatpush.msra.mxu0 %v351
    %524 = vmatpush.msra.mxu0 %v347
    %525 = vmatpush.msra.mxu0 %v343
    %526 = vmatpush.msra.mxu0 %v339
    %527 = vmatpush.msra.mxu0 %v335
    %528 = vmatpush.msra.mxu0 %v331
    %529 = vmatpush.msra.mxu0 %v327
    %530 = vmatpush.msra.mxu0 %v323
    %531 = vmatpush.msra.mxu0 %v319
    %532 = vmatpush.msra.mxu0 %v315
    %533 = vmatpush.msra.mxu0 %v311
    %534 = vmatpush.msra.mxu0 %v307
    %535 = vmatpush.msra.mxu0 %v303
    %536 = vmatpush.msra.mxu0 %v299
    %537 = vmatmul.f32.gmra.mxu0 %v193
    %v538 = vpop.f32.mrf.mxu0
    %v539 = vadd.f32 %v519, %v538
    %540 = vdwg.mxu0
    %541 = vmatpush.msra.mxu0 %v423
    %542 = vmatpush.msra.mxu0 %v419
    %543 = vmatpush.msra.mxu0 %v415
    %544 = vmatpush.msra.mxu0 %v411
    %545 = vmatpush.msra.mxu0 %v407
    %546 = vmatpush.msra.mxu0 %v403
    %547 = vmatpush.msra.mxu0 %v399
    %548 = vmatpush.msra.mxu0 %v395
    %549 = vmatpush.msra.mxu0 %v391
    %550 = vmatpush.msra.mxu0 %v387
    %551 = vmatpush.msra.mxu0 %v383
    %552 = vmatpush.msra.mxu0 %v379
    %553 = vmatpush.msra.mxu0 %v375
    %554 = vmatpush.msra.mxu0 %v371
    %555 = vmatpush.msra.mxu0 %v367
    %556 = vmatpush.msra.mxu0 %v363
    %557 = vmatmul.f32.gmra.mxu0 %v213
    %v558 = vpop.f32.mrf.mxu0
    %v559 = vadd.f32 %v539, %v558
    %560 = vdwg.mxu0
    %561 = vmatpush.msra.mxu0 %v487
    %562 = vmatpush.msra.mxu0 %v483
    %563 = vmatpush.msra.mxu0 %v479
    %564 = vmatpush.msra.mxu0 %v475
    %565 = vmatpush.msra.mxu0 %v471
    %566 = vmatpush.msra.mxu0 %v467
    %567 = vmatpush.msra.mxu0 %v463
    %568 = vmatpush.msra.mxu0 %v459
    %569 = vmatpush.msra.mxu0 %v455
    %570 = vmatpush.msra.mxu0 %v451
    %571 = vmatpush.msra.mxu0 %v447
    %572 = vmatpush.msra.mxu0 %v443
    %573 = vmatpush.msra.mxu0 %v439
    %574 = vmatpush.msra.mxu0 %v435
    %575 = vmatpush.msra.mxu0 %v431
    %576 = vmatpush.msra.mxu0 %v427
    %577 = vmatmul.f32.gmra.mxu0 %v233
    %v578 = vpop.f32.mrf.mxu0
    %v579 = vadd.f32 %v559, %v578
    %580 = vdwg.mxu0
    %581 = vmatpush.msra.mxu0 %v296
    %582 = vmatpush.msra.mxu0 %v292
    %583 = vmatpush.msra.mxu0 %v288
    %584 = vmatpush.msra.mxu0 %v284
    %585 = vmatpush.msra.mxu0 %v280
    %586 = vmatpush.msra.mxu0 %v276
    %587 = vmatpush.msra.mxu0 %v272
    %588 = vmatpush.msra.mxu0 %v268
    %589 = vmatpush.msra.mxu0 %v264
    %590 = vmatpush.msra.mxu0 %v260
    %591 = vmatpush.msra.mxu0 %v256
    %592 = vmatpush.msra.mxu0 %v252
    %593 = vmatpush.msra.mxu0 %v248
    %594 = vmatpush.msra.mxu0 %v244
    %595 = vmatpush.msra.mxu0 %v240
    %596 = vmatpush.msra.mxu0 %v236
    %597 = vmatmul.f32.gmra.mxu0 %v173
    %v598 = vpop.f32.mrf.mxu0
    %v599 = vadd.f32 %v494, %v598
    %600 = vdwg.mxu0
    %601 = vmatpush.msra.mxu0 %v360
    %602 = vmatpush.msra.mxu0 %v356
    %603 = vmatpush.msra.mxu0 %v352
    %604 = vmatpush.msra.mxu0 %v348
    %605 = vmatpush.msra.mxu0 %v344
    %606 = vmatpush.msra.mxu0 %v340
    %607 = vmatpush.msra.mxu0 %v336
    %608 = vmatpush.msra.mxu0 %v332
    %609 = vmatpush.msra.mxu0 %v328
    %610 = vmatpush.msra.mxu0 %v324
    %611 = vmatpush.msra.mxu0 %v320
    %612 = vmatpush.msra.mxu0 %v316
    %613 = vmatpush.msra.mxu0 %v312
    %614 = vmatpush.msra.mxu0 %v308
    %615 = vmatpush.msra.mxu0 %v304
    %616 = vmatpush.msra.mxu0 %v300
    %617 = vmatmul.f32.gmra.mxu0 %v193
    %v618 = vpop.f32.mrf.mxu0
    %v619 = vadd.f32 %v599, %v618
    %620 = vdwg.mxu0
    %621 = vmatpush.msra.mxu0 %v424
    %622 = vmatpush.msra.mxu0 %v420
    %623 = vmatpush.msra.mxu0 %v416
    %624 = vmatpush.msra.mxu0 %v412
    %625 = vmatpush.msra.mxu0 %v408
    %626 = vmatpush.msra.mxu0 %v404
    %627 = vmatpush.msra.mxu0 %v400
    %628 = vmatpush.msra.mxu0 %v396
    %629 = vmatpush.msra.mxu0 %v392
    %630 = vmatpush.msra.mxu0 %v388
    %631 = vmatpush.msra.mxu0 %v384
    %632 = vmatpush.msra.mxu0 %v380
    %633 = vmatpush.msra.mxu0 %v376
    %634 = vmatpush.msra.mxu0 %v372
    %635 = vmatpush.msra.mxu0 %v368
    %636 = vmatpush.msra.mxu0 %v364
    %637 = vmatmul.f32.gmra.mxu0 %v213
    %v638 = vpop.f32.mrf.mxu0
    %v639 = vadd.f32 %v619, %v638
    %640 = vdwg.mxu0
    %641 = vmatpush.msra.mxu0 %v488
    %642 = vmatpush.msra.mxu0 %v484
    %643 = vmatpush.msra.mxu0 %v480
    %644 = vmatpush.msra.mxu0 %v476
    %645 = vmatpush.msra.mxu0 %v472
    %646 = vmatpush.msra.mxu0 %v468
    %647 = vmatpush.msra.mxu0 %v464
    %648 = vmatpush.msra.mxu0 %v460
    %649 = vmatpush.msra.mxu0 %v456
    %650 = vmatpush.msra.mxu0 %v452
    %651 = vmatpush.msra.mxu0 %v448
    %652 = vmatpush.msra.mxu0 %v444
    %653 = vmatpush.msra.mxu0 %v440
    %654 = vmatpush.msra.mxu0 %v436
    %655 = vmatpush.msra.mxu0 %v432
    %656 = vmatpush.msra.mxu0 %v428
    %657 = vmatmul.f32.gmra.mxu0 %v233
    %v658 = vpop.f32.mrf.mxu0
    %v659 = vadd.f32 %v639, %v658
    %660 = vdwg.mxu0
    %661 = vmatpush.msra.mxu0 %v297
    %662 = vmatpush.msra.mxu0 %v293
    %663 = vmatpush.msra.mxu0 %v289
    %664 = vmatpush.msra.mxu0 %v285
    %665 = vmatpush.msra.mxu0 %v281
    %666 = vmatpush.msra.mxu0 %v277
    %667 = vmatpush.msra.mxu0 %v273
    %668 = vmatpush.msra.mxu0 %v269
    %669 = vmatpush.msra.mxu0 %v265
    %670 = vmatpush.msra.mxu0 %v261
    %671 = vmatpush.msra.mxu0 %v257
    %672 = vmatpush.msra.mxu0 %v253
    %673 = vmatpush.msra.mxu0 %v249
    %674 = vmatpush.msra.mxu0 %v245
    %675 = vmatpush.msra.mxu0 %v241
    %676 = vmatpush.msra.mxu0 %v237
    %677 = vmatmul.f32.gmra.mxu0 %v173
    %v678 = vpop.f32.mrf.mxu0
    %v679 = vadd.f32 %v495, %v678
    %680 = vdwg.mxu0
    %681 = vmatpush.msra.mxu0 %v361
    %682 = vmatpush.msra.mxu0 %v357
    %683 = vmatpush.msra.mxu0 %v353
    %684 = vmatpush.msra.mxu0 %v349
    %685 = vmatpush.msra.mxu0 %v345
    %686 = vmatpush.msra.mxu0 %v341
    %687 = vmatpush.msra.mxu0 %v337
    %688 = vmatpush.msra.mxu0 %v333
    %689 = vmatpush.msra.mxu0 %v329
    %690 = vmatpush.msra.mxu0 %v325
    %691 = vmatpush.msra.mxu0 %v321
    %692 = vmatpush.msra.mxu0 %v317
    %693 = vmatpush.msra.mxu0 %v313
    %694 = vmatpush.msra.mxu0 %v309
    %695 = vmatpush.msra.mxu0 %v305
    %696 = vmatpush.msra.mxu0 %v301
    %697 = vmatmul.f32.gmra.mxu0 %v193
    %v698 = vpop.f32.mrf.mxu0
    %v699 = vadd.f32 %v679, %v698
    %700 = vdwg.mxu0
    %701 = vmatpush.msra.mxu0 %v425
    %702 = vmatpush.msra.mxu0 %v421
    %703 = vmatpush.msra.mxu0 %v417
    %704 = vmatpush.msra.mxu0 %v413
    %705 = vmatpush.msra.mxu0 %v409
    %706 = vmatpush.msra.mxu0 %v405
    %707 = vmatpush.msra.mxu0 %v401
    %708 = vmatpush.msra.mxu0 %v397
    %709 = vmatpush.msra.mxu0 %v393
    %710 = vmatpush.msra.mxu0 %v389
    %711 = vmatpush.msra.mxu0 %v385
    %712 = vmatpush.msra.mxu0 %v381
    %713 = vmatpush.msra.mxu0 %v377
    %714 = vmatpush.msra.mxu0 %v373
    %715 = vmatpush.msra.mxu0 %v369
    %716 = vmatpush.msra.mxu0 %v365
    %717 = vmatmul.f32.gmra.mxu0 %v213
    %v718 = vpop.f32.mrf.mxu0
    %v719 = vadd.f32 %v699, %v718
    %720 = vdwg.mxu0
    %721 = vmatpush.msra.mxu0 %v489
    %722 = vmatpush.msra.mxu0 %v485
    %723 = vmatpush.msra.mxu0 %v481
    %724 = vmatpush.msra.mxu0 %v477
    %725 = vmatpush.msra.mxu0 %v473
    %726 = vmatpush.msra.mxu0 %v469
    %727 = vmatpush.msra.mxu0 %v465
    %728 = vmatpush.msra.mxu0 %v461
    %729 = vmatpush.msra.mxu0 %v457
    %730 = vmatpush.msra.mxu0 %v453
    %731 = vmatpush.msra.mxu0 %v449
    %732 = vmatpush.msra.mxu0 %v445
    %733 = vmatpush.msra.mxu0 %v441
    %734 = vmatpush.msra.mxu0 %v437
    %735 = vmatpush.msra.mxu0 %v433
    %736 = vmatpush.msra.mxu0 %v429
    %737 = vmatmul.f32.gmra.mxu0 %v233
    %v738 = vpop.f32.mrf.mxu0
    %v739 = vadd.f32 %v719, %v738
    %740 = vdwg.mxu0
    %741 = vmatpush.msra.mxu0 %v298
    %742 = vmatpush.msra.mxu0 %v294
    %743 = vmatpush.msra.mxu0 %v290
    %744 = vmatpush.msra.mxu0 %v286
    %745 = vmatpush.msra.mxu0 %v282
    %746 = vmatpush.msra.mxu0 %v278
    %747 = vmatpush.msra.mxu0 %v274
    %748 = vmatpush.msra.mxu0 %v270
    %749 = vmatpush.msra.mxu0 %v266
    %750 = vmatpush.msra.mxu0 %v262
    %751 = vmatpush.msra.mxu0 %v258
    %752 = vmatpush.msra.mxu0 %v254
    %753 = vmatpush.msra.mxu0 %v250
    %754 = vmatpush.msra.mxu0 %v246
    %755 = vmatpush.msra.mxu0 %v242
    %756 = vmatpush.msra.mxu0 %v238
    %757 = vmatmul.f32.gmra.mxu0 %v173
    %v758 = vpop.f32.mrf.mxu0
    %v759 = vadd.f32 %v496, %v758
    %760 = vdwg.mxu0
    %761 = vmatpush.msra.mxu0 %v362
    %762 = vmatpush.msra.mxu0 %v358
    %763 = vmatpush.msra.mxu0 %v354
    %764 = vmatpush.msra.mxu0 %v350
    %765 = vmatpush.msra.mxu0 %v346
    %766 = vmatpush.msra.mxu0 %v342
    %767 = vmatpush.msra.mxu0 %v338
    %768 = vmatpush.msra.mxu0 %v334
    %769 = vmatpush.msra.mxu0 %v330
    %770 = vmatpush.msra.mxu0 %v326
    %771 = vmatpush.msra.mxu0 %v322
    %772 = vmatpush.msra.mxu0 %v318
    %773 = vmatpush.msra.mxu0 %v314
    %774 = vmatpush.msra.mxu0 %v310
    %775 = vmatpush.msra.mxu0 %v306
    %776 = vmatpush.msra.mxu0 %v302
    %777 = vmatmul.f32.gmra.mxu0 %v193
    %v778 = vpop.f32.mrf.mxu0
    %v779 = vadd.f32 %v759, %v778
    %780 = vdwg.mxu0
    %781 = vmatpush.msra.mxu0 %v426
    %782 = vmatpush.msra.mxu0 %v422
    %783 = vmatpush.msra.mxu0 %v418
    %784 = vmatpush.msra.mxu0 %v414
    %785 = vmatpush.msra.mxu0 %v410
    %786 = vmatpush.msra.mxu0 %v406
    %787 = vmatpush.msra.mxu0 %v402
    %788 = vmatpush.msra.mxu0 %v398
    %789 = vmatpush.msra.mxu0 %v394
    %790 = vmatpush.msra.mxu0 %v390
    %791 = vmatpush.msra.mxu0 %v386
    %792 = vmatpush.msra.mxu0 %v382
    %793 = vmatpush.msra.mxu0 %v378
    %794 = vmatpush.msra.mxu0 %v374
    %795 = vmatpush.msra.mxu0 %v370
    %796 = vmatpush.msra.mxu0 %v366
    %797 = vmatmul.f32.gmra.mxu0 %v213
    %v798 = vpop.f32.mrf.mxu0
    %v799 = vadd.f32 %v779, %v798
    %800 = vdwg.mxu0
    %801 = vmatpush.msra.mxu0 %v490
    %802 = vmatpush.msra.mxu0 %v486
    %803 = vmatpush.msra.mxu0 %v482
    %804 = vmatpush.msra.mxu0 %v478
    %805 = vmatpush.msra.mxu0 %v474
    %806 = vmatpush.msra.mxu0 %v470
    %807 = vmatpush.msra.mxu0 %v466
    %808 = vmatpush.msra.mxu0 %v462
    %809 = vmatpush.msra.mxu0 %v458
    %810 = vmatpush.msra.mxu0 %v454
    %811 = vmatpush.msra.mxu0 %v450
    %812 = vmatpush.msra.mxu0 %v446
    %813 = vmatpush.msra.mxu0 %v442
    %814 = vmatpush.msra.mxu0 %v438
    %815 = vmatpush.msra.mxu0 %v434
    %816 = vmatpush.msra.mxu0 %v430
    %817 = vmatmul.f32.gmra.mxu0 %v233
    %v818 = vpop.f32.mrf.mxu0
    %v819 = vadd.f32 %v799, %v818
    %820 = vdwg.mxu0
    %v821 = vmul.f32 %v579, 0.5
    %v822 = vmul.f32 %v659, 0.5
    %v823 = vmul.f32 %v739, 0.5
    %v824 = vmul.f32 %v819, 0.5
    %v825 = vmul.f32 %v579, 0.70710677
    %v826 = vmul.f32 %v659, 0.70710677
    %v827 = vmul.f32 %v739, 0.70710677
    %v828 = vmul.f32 %v819, 0.70710677
    %v829 = vmul.f32 %v825, %v825
    %v830 = vmin.f32 16.0, %v829
    %v831 = vmul.f32 %v830, 2.1237322e-06
    %v832 = vadd.f32 %v831, 0.00028619796
    %v833 = vmul.f32 %v830, %v832
    %v834 = vadd.f32 %v833, 0.0036580483
    %v835 = vmul.f32 %v830, %v834
    %v836 = vadd.f32 %v835, 0.05243302
    %v837 = vmul.f32 %v830, %v836
    %v838 = vadd.f32 %v837, 0.18741608
    %v839 = vmul.f32 %v830, %v838
    %v840 = vadd.f32 %v839, 1.1283791
    %v841 = vmul.f32 %v825, %v840
    %v842 = vmul.f32 %v830, 3.8918573e-05
    %v843 = vadd.f32 %v842, 0.001143296
    %v844 = vmul.f32 %v830, %v843
    %v845 = vadd.f32 %v844, 0.014752088
    %v846 = vmul.f32 %v830, %v845
    %v847 = vadd.f32 %v846, 0.112945676
    %v848 = vmul.f32 %v830, %v847
    %v849 = vadd.f32 %v848, 0.4994258
    %v850 = vmul.f32 %v830, %v849
    %v851 = vadd.f32 %v850, 1.0
    %v852 = vrcp.pop %v851
    %v853 = vmul.f32 %v851, %v852
    %v854 = vsub.f32 1.0, %v853
    %v855 = vmul.f32 %v852, %v854
    %v856 = vadd.f32 %v852, %v855
    %vm857 = vweird.f32 %v851
    %vm858 = vweird.f32 %v852
    %vm859 = vmor %vm857, %vm858
    %v860 = vsel %vm859, %v852, %v856
    %v861 = vand.u32 2147483647, %v851
    %vm862 = vcmp.eq.f32.partialorder %v861, 8.507059e+37
    %v863 = vand.u32 %v851, 2147483648
    %v864 = vor.u32 1.1754944e-38, %v863
    %v865 = vsel %vm862, %v864, %v860
    %v866 = vmul.f32 %v841, %v865
    %v867 = vmin.f32 %v866, 1.0
    %v868 = vmax.f32 %v867, -1.0
    %v869 = vmul.f32 %v826, %v826
    %v870 = vmin.f32 16.0, %v869
    %v871 = vmul.f32 %v870, 2.1237322e-06
    %v872 = vadd.f32 %v871, 0.00028619796
    %v873 = vmul.f32 %v870, %v872
    %v874 = vadd.f32 %v873, 0.0036580483
    %v875 = vmul.f32 %v870, %v874
    %v876 = vadd.f32 %v875, 0.05243302
    %v877 = vmul.f32 %v870, %v876
    %v878 = vadd.f32 %v877, 0.18741608
    %v879 = vmul.f32 %v870, %v878
    %v880 = vadd.f32 %v879, 1.1283791
    %v881 = vmul.f32 %v826, %v880
    %v882 = vmul.f32 %v870, 3.8918573e-05
    %v883 = vadd.f32 %v882, 0.001143296
    %v884 = vmul.f32 %v870, %v883
    %v885 = vadd.f32 %v884, 0.014752088
    %v886 = vmul.f32 %v870, %v885
    %v887 = vadd.f32 %v886, 0.112945676
    %v888 = vmul.f32 %v870, %v887
    %v889 = vadd.f32 %v888, 0.4994258
    %v890 = vmul.f32 %v870, %v889
    %v891 = vadd.f32 %v890, 1.0
    %v892 = vrcp.pop %v891
    %v893 = vmul.f32 %v891, %v892
    %v894 = vsub.f32 1.0, %v893
    %v895 = vmul.f32 %v892, %v894
    %v896 = vadd.f32 %v892, %v895
    %vm897 = vweird.f32 %v891
    %vm898 = vweird.f32 %v892
    %vm899 = vmor %vm897, %vm898
    %v900 = vsel %vm899, %v892, %v896
    %v901 = vand.u32 2147483647, %v891
    %vm902 = vcmp.eq.f32.partialorder %v901, 8.507059e+37
    %v903 = vand.u32 %v891, 2147483648
    %v904 = vor.u32 1.1754944e-38, %v903
    %v905 = vsel %vm902, %v904, %v900
    %v906 = vmul.f32 %v881, %v905
    %v907 = vmin.f32 %v906, 1.0
    %v908 = vmax.f32 %v907, -1.0
    %v909 = vmul.f32 %v827, %v827
    %v910 = vmin.f32 16.0, %v909
    %v911 = vmul.f32 %v910, 2.1237322e-06
    %v912 = vadd.f32 %v911, 0.00028619796
    %v913 = vmul.f32 %v910, %v912
    %v914 = vadd.f32 %v913, 0.0036580483
    %v915 = vmul.f32 %v910, %v914
    %v916 = vadd.f32 %v915, 0.05243302
    %v917 = vmul.f32 %v910, %v916
    %v918 = vadd.f32 %v917, 0.18741608
    %v919 = vmul.f32 %v910, %v918
    %v920 = vadd.f32 %v919, 1.1283791
    %v921 = vmul.f32 %v827, %v920
    %v922 = vmul.f32 %v910, 3.8918573e-05
    %v923 = vadd.f32 %v922, 0.001143296
    %v924 = vmul.f32 %v910, %v923
    %v925 = vadd.f32 %v924, 0.014752088
    %v926 = vmul.f32 %v910, %v925
    %v927 = vadd.f32 %v926, 0.112945676
    %v928 = vmul.f32 %v910, %v927
    %v929 = vadd.f32 %v928, 0.4994258
    %v930 = vmul.f32 %v910, %v929
    %v931 = vadd.f32 %v930, 1.0
    %v932 = vrcp.pop %v931
    %v933 = vmul.f32 %v931, %v932
    %v934 = vsub.f32 1.0, %v933
    %v935 = vmul.f32 %v932, %v934
    %v936 = vadd.f32 %v932, %v935
    %vm937 = vweird.f32 %v931
    %vm938 = vweird.f32 %v932
    %vm939 = vmor %vm937, %vm938
    %v940 = vsel %vm939, %v932, %v936
    %v941 = vand.u32 2147483647, %v931
    %vm942 = vcmp.eq.f32.partialorder %v941, 8.507059e+37
    %v943 = vand.u32 %v931, 2147483648
    %v944 = vor.u32 1.1754944e-38, %v943
    %v945 = vsel %vm942, %v944, %v940
    %v946 = vmul.f32 %v921, %v945
    %v947 = vmin.f32 %v946, 1.0
    %v948 = vmax.f32 %v947, -1.0
    %v949 = vmul.f32 %v828, %v828
    %v950 = vmin.f32 16.0, %v949
    %v951 = vmul.f32 %v950, 2.1237322e-06
    %v952 = vadd.f32 %v951, 0.00028619796
    %v953 = vmul.f32 %v950, %v952
    %v954 = vadd.f32 %v953, 0.0036580483
    %v955 = vmul.f32 %v950, %v954
    %v956 = vadd.f32 %v955, 0.05243302
    %v957 = vmul.f32 %v950, %v956
    %v958 = vadd.f32 %v957, 0.18741608
    %v959 = vmul.f32 %v950, %v958
    %v960 = vadd.f32 %v959, 1.1283791
    %v961 = vmul.f32 %v828, %v960
    %v962 = vmul.f32 %v950, 3.8918573e-05
    %v963 = vadd.f32 %v962, 0.001143296
    %v964 = vmul.f32 %v950, %v963
    %v965 = vadd.f32 %v964, 0.014752088
    %v966 = vmul.f32 %v950, %v965
    %v967 = vadd.f32 %v966, 0.112945676
    %v968 = vmul.f32 %v950, %v967
    %v969 = vadd.f32 %v968, 0.4994258
    %v970 = vmul.f32 %v950, %v969
    %v971 = vadd.f32 %v970, 1.0
    %v972 = vrcp.pop %v971
    %v973 = vmul.f32 %v971, %v972
    %v974 = vsub.f32 1.0, %v973
    %v975 = vmul.f32 %v972, %v974
    %v976 = vadd.f32 %v972, %v975
    %vm977 = vweird.f32 %v971
    %vm978 = vweird.f32 %v972
    %vm979 = vmor %vm977, %vm978
    %v980 = vsel %vm979, %v972, %v976
    %v981 = vand.u32 2147483647, %v971
    %vm982 = vcmp.eq.f32.partialorder %v981, 8.507059e+37
    %v983 = vand.u32 %v971, 2147483648
    %v984 = vor.u32 1.1754944e-38, %v983
    %v985 = vsel %vm982, %v984, %v980
    %v986 = vmul.f32 %v961, %v985
    %v987 = vmin.f32 %v986, 1.0
    %v988 = vmax.f32 %v987, -1.0
    %v989 = vadd.f32 %v868, 1.0
    %v990 = vadd.f32 %v908, 1.0
    %v991 = vadd.f32 %v948, 1.0
    %v992 = vadd.f32 %v988, 1.0
    %v993 = vmul.f32 %v821, %v989
    %v994 = vmul.f32 %v822, %v990
    %v995 = vmul.f32 %v823, %v991
    %v996 = vmul.f32 %v824, %v992
    %s997 = scalar_lea.vmem [#allocation8], 2048
    %v998 = vld [vmem:[%s997] sm:$0xff]
    %v999 = vld [vmem:[%s997 + $0x8] sm:$0xff]
    %v1000 = vld [vmem:[%s997 + $0x10] sm:$0xff]
    %v1001 = vld [vmem:[%s997 + $0x18] sm:$0xff]
    %v1002 = vld [vmem:[%s997 + $0x20] sm:$0xff]
    %v1003 = vld [vmem:[%s997 + $0x28] sm:$0xff]
    %v1004 = vld [vmem:[%s997 + $0x30] sm:$0xff]
    %v1005 = vld [vmem:[%s997 + $0x38] sm:$0xff]
    %v1006 = vld [vmem:[%s997 + $0x40] sm:$0xff]
    %v1007 = vld [vmem:[%s997 + $0x48] sm:$0xff]
    %v1008 = vld [vmem:[%s997 + $0x50] sm:$0xff]
    %v1009 = vld [vmem:[%s997 + $0x58] sm:$0xff]
    %v1010 = vld [vmem:[%s997 + $0x60] sm:$0xff]
    %v1011 = vld [vmem:[%s997 + $0x68] sm:$0xff]
    %v1012 = vld [vmem:[%s997 + $0x70] sm:$0xff]
    %v1013 = vld [vmem:[%s997 + $0x78] sm:$0xff]
    %v1014 = vld [vmem:[%s997 + $0x80] sm:$0xff]
    %v1015 = vld [vmem:[%s997 + $0x88] sm:$0xff]
    %v1016 = vld [vmem:[%s997 + $0x90] sm:$0xff]
    %v1017 = vld [vmem:[%s997 + $0x98] sm:$0xff]
    %v1018 = vld [vmem:[%s997 + $0xa0] sm:$0xff]
    %v1019 = vld [vmem:[%s997 + $0xa8] sm:$0xff]
    %v1020 = vld [vmem:[%s997 + $0xb0] sm:$0xff]
    %v1021 = vld [vmem:[%s997 + $0xb8] sm:$0xff]
    %v1022 = vld [vmem:[%s997 + $0xc0] sm:$0xff]
    %v1023 = vld [vmem:[%s997 + $0xc8] sm:$0xff]
    %v1024 = vld [vmem:[%s997 + $0xd0] sm:$0xff]
    %v1025 = vld [vmem:[%s997 + $0xd8] sm:$0xff]
    %v1026 = vld [vmem:[%s997 + $0xe0] sm:$0xff]
    %v1027 = vld [vmem:[%s997 + $0xe8] sm:$0xff]
    %v1028 = vld [vmem:[%s997 + $0xf0] sm:$0xff]
    %v1029 = vld [vmem:[%s997 + $0xf8] sm:$0xff]
    %v1030 = vld [vmem:[%s997 + $0x100] sm:$0xff]
    %v1031 = vld [vmem:[%s997 + $0x108] sm:$0xff]
    %v1032 = vld [vmem:[%s997 + $0x110] sm:$0xff]
    %v1033 = vld [vmem:[%s997 + $0x118] sm:$0xff]
    %v1034 = vld [vmem:[%s997 + $0x120] sm:$0xff]
    %v1035 = vld [vmem:[%s997 + $0x128] sm:$0xff]
    %v1036 = vld [vmem:[%s997 + $0x130] sm:$0xff]
    %v1037 = vld [vmem:[%s997 + $0x138] sm:$0xff]
    %v1038 = vld [vmem:[%s997 + $0x140] sm:$0xff]
    %v1039 = vld [vmem:[%s997 + $0x148] sm:$0xff]
    %v1040 = vld [vmem:[%s997 + $0x150] sm:$0xff]
    %v1041 = vld [vmem:[%s997 + $0x158] sm:$0xff]
    %v1042 = vld [vmem:[%s997 + $0x160] sm:$0xff]
    %v1043 = vld [vmem:[%s997 + $0x168] sm:$0xff]
    %v1044 = vld [vmem:[%s997 + $0x170] sm:$0xff]
    %v1045 = vld [vmem:[%s997 + $0x178] sm:$0xff]
    %v1046 = vld [vmem:[%s997 + $0x180] sm:$0xff]
    %v1047 = vld [vmem:[%s997 + $0x188] sm:$0xff]
    %v1048 = vld [vmem:[%s997 + $0x190] sm:$0xff]
    %v1049 = vld [vmem:[%s997 + $0x198] sm:$0xff]
    %v1050 = vld [vmem:[%s997 + $0x1a0] sm:$0xff]
    %v1051 = vld [vmem:[%s997 + $0x1a8] sm:$0xff]
    %v1052 = vld [vmem:[%s997 + $0x1b0] sm:$0xff]
    %v1053 = vld [vmem:[%s997 + $0x1b8] sm:$0xff]
    %v1054 = vld [vmem:[%s997 + $0x1c0] sm:$0xff]
    %v1055 = vld [vmem:[%s997 + $0x1c8] sm:$0xff]
    %v1056 = vld [vmem:[%s997 + $0x1d0] sm:$0xff]
    %v1057 = vld [vmem:[%s997 + $0x1d8] sm:$0xff]
    %v1058 = vld [vmem:[%s997 + $0x1e0] sm:$0xff]
    %v1059 = vld [vmem:[%s997 + $0x1e8] sm:$0xff]
    %v1060 = vld [vmem:[%s997 + $0x1f0] sm:$0xff]
    %v1061 = vld [vmem:[%s997 + $0x1f8] sm:$0xff]
    %v1062 = vld [vmem:[%s997 + $0x200] sm:$0xff]
    %v1063 = vld [vmem:[%s997 + $0x208] sm:$0xff]
    %v1064 = vld [vmem:[%s997 + $0x210] sm:$0xff]
    %v1065 = vld [vmem:[%s997 + $0x218] sm:$0xff]
    %v1066 = vld [vmem:[%s997 + $0x220] sm:$0xff]
    %v1067 = vld [vmem:[%s997 + $0x228] sm:$0xff]
    %v1068 = vld [vmem:[%s997 + $0x230] sm:$0xff]
    %v1069 = vld [vmem:[%s997 + $0x238] sm:$0xff]
    %v1070 = vld [vmem:[%s997 + $0x240] sm:$0xff]
    %v1071 = vld [vmem:[%s997 + $0x248] sm:$0xff]
    %v1072 = vld [vmem:[%s997 + $0x250] sm:$0xff]
    %v1073 = vld [vmem:[%s997 + $0x258] sm:$0xff]
    %v1074 = vld [vmem:[%s997 + $0x260] sm:$0xff]
    %v1075 = vld [vmem:[%s997 + $0x268] sm:$0xff]
    %v1076 = vld [vmem:[%s997 + $0x270] sm:$0xff]
    %v1077 = vld [vmem:[%s997 + $0x278] sm:$0xff]
    %v1078 = vld [vmem:[%s997 + $0x280] sm:$0xff]
    %v1079 = vld [vmem:[%s997 + $0x288] sm:$0xff]
    %v1080 = vld [vmem:[%s997 + $0x290] sm:$0xff]
    %v1081 = vld [vmem:[%s997 + $0x298] sm:$0xff]
    %v1082 = vld [vmem:[%s997 + $0x2a0] sm:$0xff]
    %v1083 = vld [vmem:[%s997 + $0x2a8] sm:$0xff]
    %v1084 = vld [vmem:[%s997 + $0x2b0] sm:$0xff]
    %v1085 = vld [vmem:[%s997 + $0x2b8] sm:$0xff]
    %v1086 = vld [vmem:[%s997 + $0x2c0] sm:$0xff]
    %v1087 = vld [vmem:[%s997 + $0x2c8] sm:$0xff]
    %v1088 = vld [vmem:[%s997 + $0x2d0] sm:$0xff]
    %v1089 = vld [vmem:[%s997 + $0x2d8] sm:$0xff]
    %v1090 = vld [vmem:[%s997 + $0x2e0] sm:$0xff]
    %v1091 = vld [vmem:[%s997 + $0x2e8] sm:$0xff]
    %v1092 = vld [vmem:[%s997 + $0x2f0] sm:$0xff]
    %v1093 = vld [vmem:[%s997 + $0x2f8] sm:$0xff]
    %v1094 = vld [vmem:[%s997 + $0x300] sm:$0xff]
    %v1095 = vld [vmem:[%s997 + $0x308] sm:$0xff]
    %v1096 = vld [vmem:[%s997 + $0x310] sm:$0xff]
    %v1097 = vld [vmem:[%s997 + $0x318] sm:$0xff]
    %v1098 = vld [vmem:[%s997 + $0x320] sm:$0xff]
    %v1099 = vld [vmem:[%s997 + $0x328] sm:$0xff]
    %v1100 = vld [vmem:[%s997 + $0x330] sm:$0xff]
    %v1101 = vld [vmem:[%s997 + $0x338] sm:$0xff]
    %v1102 = vld [vmem:[%s997 + $0x340] sm:$0xff]
    %v1103 = vld [vmem:[%s997 + $0x348] sm:$0xff]
    %v1104 = vld [vmem:[%s997 + $0x350] sm:$0xff]
    %v1105 = vld [vmem:[%s997 + $0x358] sm:$0xff]
    %v1106 = vld [vmem:[%s997 + $0x360] sm:$0xff]
    %v1107 = vld [vmem:[%s997 + $0x368] sm:$0xff]
    %v1108 = vld [vmem:[%s997 + $0x370] sm:$0xff]
    %v1109 = vld [vmem:[%s997 + $0x378] sm:$0xff]
    %v1110 = vld [vmem:[%s997 + $0x380] sm:$0xff]
    %v1111 = vld [vmem:[%s997 + $0x388] sm:$0xff]
    %v1112 = vld [vmem:[%s997 + $0x390] sm:$0xff]
    %v1113 = vld [vmem:[%s997 + $0x398] sm:$0xff]
    %v1114 = vld [vmem:[%s997 + $0x3a0] sm:$0xff]
    %v1115 = vld [vmem:[%s997 + $0x3a8] sm:$0xff]
    %v1116 = vld [vmem:[%s997 + $0x3b0] sm:$0xff]
    %v1117 = vld [vmem:[%s997 + $0x3b8] sm:$0xff]
    %v1118 = vld [vmem:[%s997 + $0x3c0] sm:$0xff]
    %v1119 = vld [vmem:[%s997 + $0x3c8] sm:$0xff]
    %v1120 = vld [vmem:[%s997 + $0x3d0] sm:$0xff]
    %v1121 = vld [vmem:[%s997 + $0x3d8] sm:$0xff]
    %v1122 = vld [vmem:[%s997 + $0x3e0] sm:$0xff]
    %v1123 = vld [vmem:[%s997 + $0x3e8] sm:$0xff]
    %v1124 = vld [vmem:[%s997 + $0x3f0] sm:$0xff]
    %v1125 = vld [vmem:[%s997 + $0x3f8] sm:$0xff]
    %v1126 = vld [vmem:[%s997 + $0x400] sm:$0xff]
    %v1127 = vld [vmem:[%s997 + $0x408] sm:$0xff]
    %v1128 = vld [vmem:[%s997 + $0x410] sm:$0xff]
    %v1129 = vld [vmem:[%s997 + $0x418] sm:$0xff]
    %v1130 = vld [vmem:[%s997 + $0x420] sm:$0xff]
    %v1131 = vld [vmem:[%s997 + $0x428] sm:$0xff]
    %v1132 = vld [vmem:[%s997 + $0x430] sm:$0xff]
    %v1133 = vld [vmem:[%s997 + $0x438] sm:$0xff]
    %v1134 = vld [vmem:[%s997 + $0x440] sm:$0xff]
    %v1135 = vld [vmem:[%s997 + $0x448] sm:$0xff]
    %v1136 = vld [vmem:[%s997 + $0x450] sm:$0xff]
    %v1137 = vld [vmem:[%s997 + $0x458] sm:$0xff]
    %v1138 = vld [vmem:[%s997 + $0x460] sm:$0xff]
    %v1139 = vld [vmem:[%s997 + $0x468] sm:$0xff]
    %v1140 = vld [vmem:[%s997 + $0x470] sm:$0xff]
    %v1141 = vld [vmem:[%s997 + $0x478] sm:$0xff]
    %v1142 = vld [vmem:[%s997 + $0x480] sm:$0xff]
    %v1143 = vld [vmem:[%s997 + $0x488] sm:$0xff]
    %v1144 = vld [vmem:[%s997 + $0x490] sm:$0xff]
    %v1145 = vld [vmem:[%s997 + $0x498] sm:$0xff]
    %v1146 = vld [vmem:[%s997 + $0x4a0] sm:$0xff]
    %v1147 = vld [vmem:[%s997 + $0x4a8] sm:$0xff]
    %v1148 = vld [vmem:[%s997 + $0x4b0] sm:$0xff]
    %v1149 = vld [vmem:[%s997 + $0x4b8] sm:$0xff]
    %v1150 = vld [vmem:[%s997 + $0x4c0] sm:$0xff]
    %v1151 = vld [vmem:[%s997 + $0x4c8] sm:$0xff]
    %v1152 = vld [vmem:[%s997 + $0x4d0] sm:$0xff]
    %v1153 = vld [vmem:[%s997 + $0x4d8] sm:$0xff]
    %v1154 = vld [vmem:[%s997 + $0x4e0] sm:$0xff]
    %v1155 = vld [vmem:[%s997 + $0x4e8] sm:$0xff]
    %v1156 = vld [vmem:[%s997 + $0x4f0] sm:$0xff]
    %v1157 = vld [vmem:[%s997 + $0x4f8] sm:$0xff]
    %v1158 = vld [vmem:[%s997 + $0x500] sm:$0xff]
    %v1159 = vld [vmem:[%s997 + $0x508] sm:$0xff]
    %v1160 = vld [vmem:[%s997 + $0x510] sm:$0xff]
    %v1161 = vld [vmem:[%s997 + $0x518] sm:$0xff]
    %v1162 = vld [vmem:[%s997 + $0x520] sm:$0xff]
    %v1163 = vld [vmem:[%s997 + $0x528] sm:$0xff]
    %v1164 = vld [vmem:[%s997 + $0x530] sm:$0xff]
    %v1165 = vld [vmem:[%s997 + $0x538] sm:$0xff]
    %v1166 = vld [vmem:[%s997 + $0x540] sm:$0xff]
    %v1167 = vld [vmem:[%s997 + $0x548] sm:$0xff]
    %v1168 = vld [vmem:[%s997 + $0x550] sm:$0xff]
    %v1169 = vld [vmem:[%s997 + $0x558] sm:$0xff]
    %v1170 = vld [vmem:[%s997 + $0x560] sm:$0xff]
    %v1171 = vld [vmem:[%s997 + $0x568] sm:$0xff]
    %v1172 = vld [vmem:[%s997 + $0x570] sm:$0xff]
    %v1173 = vld [vmem:[%s997 + $0x578] sm:$0xff]
    %v1174 = vld [vmem:[%s997 + $0x580] sm:$0xff]
    %v1175 = vld [vmem:[%s997 + $0x588] sm:$0xff]
    %v1176 = vld [vmem:[%s997 + $0x590] sm:$0xff]
    %v1177 = vld [vmem:[%s997 + $0x598] sm:$0xff]
    %v1178 = vld [vmem:[%s997 + $0x5a0] sm:$0xff]
    %v1179 = vld [vmem:[%s997 + $0x5a8] sm:$0xff]
    %v1180 = vld [vmem:[%s997 + $0x5b0] sm:$0xff]
    %v1181 = vld [vmem:[%s997 + $0x5b8] sm:$0xff]
    %v1182 = vld [vmem:[%s997 + $0x5c0] sm:$0xff]
    %v1183 = vld [vmem:[%s997 + $0x5c8] sm:$0xff]
    %v1184 = vld [vmem:[%s997 + $0x5d0] sm:$0xff]
    %v1185 = vld [vmem:[%s997 + $0x5d8] sm:$0xff]
    %v1186 = vld [vmem:[%s997 + $0x5e0] sm:$0xff]
    %v1187 = vld [vmem:[%s997 + $0x5e8] sm:$0xff]
    %v1188 = vld [vmem:[%s997 + $0x5f0] sm:$0xff]
    %v1189 = vld [vmem:[%s997 + $0x5f8] sm:$0xff]
    %v1190 = vld [vmem:[%s997 + $0x600] sm:$0xff]
    %v1191 = vld [vmem:[%s997 + $0x608] sm:$0xff]
    %v1192 = vld [vmem:[%s997 + $0x610] sm:$0xff]
    %v1193 = vld [vmem:[%s997 + $0x618] sm:$0xff]
    %v1194 = vld [vmem:[%s997 + $0x620] sm:$0xff]
    %v1195 = vld [vmem:[%s997 + $0x628] sm:$0xff]
    %v1196 = vld [vmem:[%s997 + $0x630] sm:$0xff]
    %v1197 = vld [vmem:[%s997 + $0x638] sm:$0xff]
    %v1198 = vld [vmem:[%s997 + $0x640] sm:$0xff]
    %v1199 = vld [vmem:[%s997 + $0x648] sm:$0xff]
    %v1200 = vld [vmem:[%s997 + $0x650] sm:$0xff]
    %v1201 = vld [vmem:[%s997 + $0x658] sm:$0xff]
    %v1202 = vld [vmem:[%s997 + $0x660] sm:$0xff]
    %v1203 = vld [vmem:[%s997 + $0x668] sm:$0xff]
    %v1204 = vld [vmem:[%s997 + $0x670] sm:$0xff]
    %v1205 = vld [vmem:[%s997 + $0x678] sm:$0xff]
    %v1206 = vld [vmem:[%s997 + $0x680] sm:$0xff]
    %v1207 = vld [vmem:[%s997 + $0x688] sm:$0xff]
    %v1208 = vld [vmem:[%s997 + $0x690] sm:$0xff]
    %v1209 = vld [vmem:[%s997 + $0x698] sm:$0xff]
    %v1210 = vld [vmem:[%s997 + $0x6a0] sm:$0xff]
    %v1211 = vld [vmem:[%s997 + $0x6a8] sm:$0xff]
    %v1212 = vld [vmem:[%s997 + $0x6b0] sm:$0xff]
    %v1213 = vld [vmem:[%s997 + $0x6b8] sm:$0xff]
    %v1214 = vld [vmem:[%s997 + $0x6c0] sm:$0xff]
    %v1215 = vld [vmem:[%s997 + $0x6c8] sm:$0xff]
    %v1216 = vld [vmem:[%s997 + $0x6d0] sm:$0xff]
    %v1217 = vld [vmem:[%s997 + $0x6d8] sm:$0xff]
    %v1218 = vld [vmem:[%s997 + $0x6e0] sm:$0xff]
    %v1219 = vld [vmem:[%s997 + $0x6e8] sm:$0xff]
    %v1220 = vld [vmem:[%s997 + $0x6f0] sm:$0xff]
    %v1221 = vld [vmem:[%s997 + $0x6f8] sm:$0xff]
    %v1222 = vld [vmem:[%s997 + $0x700] sm:$0xff]
    %v1223 = vld [vmem:[%s997 + $0x708] sm:$0xff]
    %v1224 = vld [vmem:[%s997 + $0x710] sm:$0xff]
    %v1225 = vld [vmem:[%s997 + $0x718] sm:$0xff]
    %v1226 = vld [vmem:[%s997 + $0x720] sm:$0xff]
    %v1227 = vld [vmem:[%s997 + $0x728] sm:$0xff]
    %v1228 = vld [vmem:[%s997 + $0x730] sm:$0xff]
    %v1229 = vld [vmem:[%s997 + $0x738] sm:$0xff]
    %v1230 = vld [vmem:[%s997 + $0x740] sm:$0xff]
    %v1231 = vld [vmem:[%s997 + $0x748] sm:$0xff]
    %v1232 = vld [vmem:[%s997 + $0x750] sm:$0xff]
    %v1233 = vld [vmem:[%s997 + $0x758] sm:$0xff]
    %v1234 = vld [vmem:[%s997 + $0x760] sm:$0xff]
    %v1235 = vld [vmem:[%s997 + $0x768] sm:$0xff]
    %v1236 = vld [vmem:[%s997 + $0x770] sm:$0xff]
    %v1237 = vld [vmem:[%s997 + $0x778] sm:$0xff]
    %v1238 = vld [vmem:[%s997 + $0x780] sm:$0xff]
    %v1239 = vld [vmem:[%s997 + $0x788] sm:$0xff]
    %v1240 = vld [vmem:[%s997 + $0x790] sm:$0xff]
    %v1241 = vld [vmem:[%s997 + $0x798] sm:$0xff]
    %v1242 = vld [vmem:[%s997 + $0x7a0] sm:$0xff]
    %v1243 = vld [vmem:[%s997 + $0x7a8] sm:$0xff]
    %v1244 = vld [vmem:[%s997 + $0x7b0] sm:$0xff]
    %v1245 = vld [vmem:[%s997 + $0x7b8] sm:$0xff]
    %v1246 = vld [vmem:[%s997 + $0x7c0] sm:$0xff]
    %v1247 = vld [vmem:[%s997 + $0x7c8] sm:$0xff]
    %v1248 = vld [vmem:[%s997 + $0x7d0] sm:$0xff]
    %v1249 = vld [vmem:[%s997 + $0x7d8] sm:$0xff]
    %v1250 = vld [vmem:[%s997 + $0x7e0] sm:$0xff]
    %v1251 = vld [vmem:[%s997 + $0x7e8] sm:$0xff]
    %v1252 = vld [vmem:[%s997 + $0x7f0] sm:$0xff]
    %v1253 = vld [vmem:[%s997 + $0x7f8] sm:$0xff]
    %s1254 = scalar_lea.vmem [#allocation10], 4
    %v1255 = vld [vmem:[%s1254] sm:$0xf]
    %v1257 = vperm.slane %v1255, 0
    %v1258 = vperm.slane %v1255, 1
    %v1259 = vperm.slane %v1255, 2
    %v1260 = vperm.slane %v1255, 3
    %1265 = vmatpush.msra.mxu0 %v1058
    %1266 = vmatpush.msra.mxu0 %v1054
    %1267 = vmatpush.msra.mxu0 %v1050
    %1268 = vmatpush.msra.mxu0 %v1046
    %1269 = vmatpush.msra.mxu0 %v1042
    %1270 = vmatpush.msra.mxu0 %v1038
    %1271 = vmatpush.msra.mxu0 %v1034
    %1272 = vmatpush.msra.mxu0 %v1030
    %1273 = vmatpush.msra.mxu0 %v1026
    %1274 = vmatpush.msra.mxu0 %v1022
    %1275 = vmatpush.msra.mxu0 %v1018
    %1276 = vmatpush.msra.mxu0 %v1014
    %1277 = vmatpush.msra.mxu0 %v1010
    %1278 = vmatpush.msra.mxu0 %v1006
    %1279 = vmatpush.msra.mxu0 %v1002
    %1280 = vmatpush.msra.mxu0 %v998
    %1281 = vmatmul.f32.gmra.mxu0 %v993
    %v1282 = vpop.f32.mrf.mxu0
    %v1283 = vadd.f32 %v1257, %v1282
    %1284 = vdwg.mxu0
    %1285 = vmatpush.msra.mxu0 %v1122
    %1286 = vmatpush.msra.mxu0 %v1118
    %1287 = vmatpush.msra.mxu0 %v1114
    %1288 = vmatpush.msra.mxu0 %v1110
    %1289 = vmatpush.msra.mxu0 %v1106
    %1290 = vmatpush.msra.mxu0 %v1102
    %1291 = vmatpush.msra.mxu0 %v1098
    %1292 = vmatpush.msra.mxu0 %v1094
    %1293 = vmatpush.msra.mxu0 %v1090
    %1294 = vmatpush.msra.mxu0 %v1086
    %1295 = vmatpush.msra.mxu0 %v1082
    %1296 = vmatpush.msra.mxu0 %v1078
    %1297 = vmatpush.msra.mxu0 %v1074
    %1298 = vmatpush.msra.mxu0 %v1070
    %1299 = vmatpush.msra.mxu0 %v1066
    %1300 = vmatpush.msra.mxu0 %v1062
    %1301 = vmatmul.f32.gmra.mxu0 %v994
    %v1302 = vpop.f32.mrf.mxu0
    %v1303 = vadd.f32 %v1283, %v1302
    %1304 = vdwg.mxu0
    %1305 = vmatpush.msra.mxu0 %v1186
    %1306 = vmatpush.msra.mxu0 %v1182
    %1307 = vmatpush.msra.mxu0 %v1178
    %1308 = vmatpush.msra.mxu0 %v1174
    %1309 = vmatpush.msra.mxu0 %v1170
    %1310 = vmatpush.msra.mxu0 %v1166
    %1311 = vmatpush.msra.mxu0 %v1162
    %1312 = vmatpush.msra.mxu0 %v1158
    %1313 = vmatpush.msra.mxu0 %v1154
    %1314 = vmatpush.msra.mxu0 %v1150
    %1315 = vmatpush.msra.mxu0 %v1146
    %1316 = vmatpush.msra.mxu0 %v1142
    %1317 = vmatpush.msra.mxu0 %v1138
    %1318 = vmatpush.msra.mxu0 %v1134
    %1319 = vmatpush.msra.mxu0 %v1130
    %1320 = vmatpush.msra.mxu0 %v1126
    %1321 = vmatmul.f32.gmra.mxu0 %v995
    %v1322 = vpop.f32.mrf.mxu0
    %v1323 = vadd.f32 %v1303, %v1322
    %1324 = vdwg.mxu0
    %1325 = vmatpush.msra.mxu0 %v1250
    %1326 = vmatpush.msra.mxu0 %v1246
    %1327 = vmatpush.msra.mxu0 %v1242
    %1328 = vmatpush.msra.mxu0 %v1238
    %1329 = vmatpush.msra.mxu0 %v1234
    %1330 = vmatpush.msra.mxu0 %v1230
    %1331 = vmatpush.msra.mxu0 %v1226
    %1332 = vmatpush.msra.mxu0 %v1222
    %1333 = vmatpush.msra.mxu0 %v1218
    %1334 = vmatpush.msra.mxu0 %v1214
    %1335 = vmatpush.msra.mxu0 %v1210
    %1336 = vmatpush.msra.mxu0 %v1206
    %1337 = vmatpush.msra.mxu0 %v1202
    %1338 = vmatpush.msra.mxu0 %v1198
    %1339 = vmatpush.msra.mxu0 %v1194
    %1340 = vmatpush.msra.mxu0 %v1190
    %1341 = vmatmul.f32.gmra.mxu0 %v996
    %v1342 = vpop.f32.mrf.mxu0
    %v1343 = vadd.f32 %v1323, %v1342
    %1344 = vdwg.mxu0
    %1345 = vmatpush.msra.mxu0 %v1059
    %1346 = vmatpush.msra.mxu0 %v1055
    %1347 = vmatpush.msra.mxu0 %v1051
    %1348 = vmatpush.msra.mxu0 %v1047
    %1349 = vmatpush.msra.mxu0 %v1043
    %1350 = vmatpush.msra.mxu0 %v1039
    %1351 = vmatpush.msra.mxu0 %v1035
    %1352 = vmatpush.msra.mxu0 %v1031
    %1353 = vmatpush.msra.mxu0 %v1027
    %1354 = vmatpush.msra.mxu0 %v1023
    %1355 = vmatpush.msra.mxu0 %v1019
    %1356 = vmatpush.msra.mxu0 %v1015
    %1357 = vmatpush.msra.mxu0 %v1011
    %1358 = vmatpush.msra.mxu0 %v1007
    %1359 = vmatpush.msra.mxu0 %v1003
    %1360 = vmatpush.msra.mxu0 %v999
    %1361 = vmatmul.f32.gmra.mxu0 %v993
    %v1362 = vpop.f32.mrf.mxu0
    %v1363 = vadd.f32 %v1258, %v1362
    %1364 = vdwg.mxu0
    %1365 = vmatpush.msra.mxu0 %v1123
    %1366 = vmatpush.msra.mxu0 %v1119
    %1367 = vmatpush.msra.mxu0 %v1115
    %1368 = vmatpush.msra.mxu0 %v1111
    %1369 = vmatpush.msra.mxu0 %v1107
    %1370 = vmatpush.msra.mxu0 %v1103
    %1371 = vmatpush.msra.mxu0 %v1099
    %1372 = vmatpush.msra.mxu0 %v1095
    %1373 = vmatpush.msra.mxu0 %v1091
    %1374 = vmatpush.msra.mxu0 %v1087
    %1375 = vmatpush.msra.mxu0 %v1083
    %1376 = vmatpush.msra.mxu0 %v1079
    %1377 = vmatpush.msra.mxu0 %v1075
    %1378 = vmatpush.msra.mxu0 %v1071
    %1379 = vmatpush.msra.mxu0 %v1067
    %1380 = vmatpush.msra.mxu0 %v1063
    %1381 = vmatmul.f32.gmra.mxu0 %v994
    %v1382 = vpop.f32.mrf.mxu0
    %v1383 = vadd.f32 %v1363, %v1382
    %1384 = vdwg.mxu0
    %1385 = vmatpush.msra.mxu0 %v1187
    %1386 = vmatpush.msra.mxu0 %v1183
    %1387 = vmatpush.msra.mxu0 %v1179
    %1388 = vmatpush.msra.mxu0 %v1175
    %1389 = vmatpush.msra.mxu0 %v1171
    %1390 = vmatpush.msra.mxu0 %v1167
    %1391 = vmatpush.msra.mxu0 %v1163
    %1392 = vmatpush.msra.mxu0 %v1159
    %1393 = vmatpush.msra.mxu0 %v1155
    %1394 = vmatpush.msra.mxu0 %v1151
    %1395 = vmatpush.msra.mxu0 %v1147
    %1396 = vmatpush.msra.mxu0 %v1143
    %1397 = vmatpush.msra.mxu0 %v1139
    %1398 = vmatpush.msra.mxu0 %v1135
    %1399 = vmatpush.msra.mxu0 %v1131
    %1400 = vmatpush.msra.mxu0 %v1127
    %1401 = vmatmul.f32.gmra.mxu0 %v995
    %v1402 = vpop.f32.mrf.mxu0
    %v1403 = vadd.f32 %v1383, %v1402
    %1404 = vdwg.mxu0
    %1405 = vmatpush.msra.mxu0 %v1251
    %1406 = vmatpush.msra.mxu0 %v1247
    %1407 = vmatpush.msra.mxu0 %v1243
    %1408 = vmatpush.msra.mxu0 %v1239
    %1409 = vmatpush.msra.mxu0 %v1235
    %1410 = vmatpush.msra.mxu0 %v1231
    %1411 = vmatpush.msra.mxu0 %v1227
    %1412 = vmatpush.msra.mxu0 %v1223
    %1413 = vmatpush.msra.mxu0 %v1219
    %1414 = vmatpush.msra.mxu0 %v1215
    %1415 = vmatpush.msra.mxu0 %v1211
    %1416 = vmatpush.msra.mxu0 %v1207
    %1417 = vmatpush.msra.mxu0 %v1203
    %1418 = vmatpush.msra.mxu0 %v1199
    %1419 = vmatpush.msra.mxu0 %v1195
    %1420 = vmatpush.msra.mxu0 %v1191
    %1421 = vmatmul.f32.gmra.mxu0 %v996
    %v1422 = vpop.f32.mrf.mxu0
    %v1423 = vadd.f32 %v1403, %v1422
    %1424 = vdwg.mxu0
    %1425 = vmatpush.msra.mxu0 %v1060
    %1426 = vmatpush.msra.mxu0 %v1056
    %1427 = vmatpush.msra.mxu0 %v1052
    %1428 = vmatpush.msra.mxu0 %v1048
    %1429 = vmatpush.msra.mxu0 %v1044
    %1430 = vmatpush.msra.mxu0 %v1040
    %1431 = vmatpush.msra.mxu0 %v1036
    %1432 = vmatpush.msra.mxu0 %v1032
    %1433 = vmatpush.msra.mxu0 %v1028
    %1434 = vmatpush.msra.mxu0 %v1024
    %1435 = vmatpush.msra.mxu0 %v1020
    %1436 = vmatpush.msra.mxu0 %v1016
    %1437 = vmatpush.msra.mxu0 %v1012
    %1438 = vmatpush.msra.mxu0 %v1008
    %1439 = vmatpush.msra.mxu0 %v1004
    %1440 = vmatpush.msra.mxu0 %v1000
    %1441 = vmatmul.f32.gmra.mxu0 %v993
    %v1442 = vpop.f32.mrf.mxu0
    %v1443 = vadd.f32 %v1259, %v1442
    %1444 = vdwg.mxu0
    %1445 = vmatpush.msra.mxu0 %v1124
    %1446 = vmatpush.msra.mxu0 %v1120
    %1447 = vmatpush.msra.mxu0 %v1116
    %1448 = vmatpush.msra.mxu0 %v1112
    %1449 = vmatpush.msra.mxu0 %v1108
    %1450 = vmatpush.msra.mxu0 %v1104
    %1451 = vmatpush.msra.mxu0 %v1100
    %1452 = vmatpush.msra.mxu0 %v1096
    %1453 = vmatpush.msra.mxu0 %v1092
    %1454 = vmatpush.msra.mxu0 %v1088
    %1455 = vmatpush.msra.mxu0 %v1084
    %1456 = vmatpush.msra.mxu0 %v1080
    %1457 = vmatpush.msra.mxu0 %v1076
    %1458 = vmatpush.msra.mxu0 %v1072
    %1459 = vmatpush.msra.mxu0 %v1068
    %1460 = vmatpush.msra.mxu0 %v1064
    %1461 = vmatmul.f32.gmra.mxu0 %v994
    %v1462 = vpop.f32.mrf.mxu0
    %v1463 = vadd.f32 %v1443, %v1462
    %1464 = vdwg.mxu0
    %1465 = vmatpush.msra.mxu0 %v1188
    %1466 = vmatpush.msra.mxu0 %v1184
    %1467 = vmatpush.msra.mxu0 %v1180
    %1468 = vmatpush.msra.mxu0 %v1176
    %1469 = vmatpush.msra.mxu0 %v1172
    %1470 = vmatpush.msra.mxu0 %v1168
    %1471 = vmatpush.msra.mxu0 %v1164
    %1472 = vmatpush.msra.mxu0 %v1160
    %1473 = vmatpush.msra.mxu0 %v1156
    %1474 = vmatpush.msra.mxu0 %v1152
    %1475 = vmatpush.msra.mxu0 %v1148
    %1476 = vmatpush.msra.mxu0 %v1144
    %1477 = vmatpush.msra.mxu0 %v1140
    %1478 = vmatpush.msra.mxu0 %v1136
    %1479 = vmatpush.msra.mxu0 %v1132
    %1480 = vmatpush.msra.mxu0 %v1128
    %1481 = vmatmul.f32.gmra.mxu0 %v995
    %v1482 = vpop.f32.mrf.mxu0
    %v1483 = vadd.f32 %v1463, %v1482
    %1484 = vdwg.mxu0
    %1485 = vmatpush.msra.mxu0 %v1252
    %1486 = vmatpush.msra.mxu0 %v1248
    %1487 = vmatpush.msra.mxu0 %v1244
    %1488 = vmatpush.msra.mxu0 %v1240
    %1489 = vmatpush.msra.mxu0 %v1236
    %1490 = vmatpush.msra.mxu0 %v1232
    %1491 = vmatpush.msra.mxu0 %v1228
    %1492 = vmatpush.msra.mxu0 %v1224
    %1493 = vmatpush.msra.mxu0 %v1220
    %1494 = vmatpush.msra.mxu0 %v1216
    %1495 = vmatpush.msra.mxu0 %v1212
    %1496 = vmatpush.msra.mxu0 %v1208
    %1497 = vmatpush.msra.mxu0 %v1204
    %1498 = vmatpush.msra.mxu0 %v1200
    %1499 = vmatpush.msra.mxu0 %v1196
    %1500 = vmatpush.msra.mxu0 %v1192
    %1501 = vmatmul.f32.gmra.mxu0 %v996
    %v1502 = vpop.f32.mrf.mxu0
    %v1503 = vadd.f32 %v1483, %v1502
    %1504 = vdwg.mxu0
    %1505 = vmatpush.msra.mxu0 %v1061
    %1506 = vmatpush.msra.mxu0 %v1057
    %1507 = vmatpush.msra.mxu0 %v1053
    %1508 = vmatpush.msra.mxu0 %v1049
    %1509 = vmatpush.msra.mxu0 %v1045
    %1510 = vmatpush.msra.mxu0 %v1041
    %1511 = vmatpush.msra.mxu0 %v1037
    %1512 = vmatpush.msra.mxu0 %v1033
    %1513 = vmatpush.msra.mxu0 %v1029
    %1514 = vmatpush.msra.mxu0 %v1025
    %1515 = vmatpush.msra.mxu0 %v1021
    %1516 = vmatpush.msra.mxu0 %v1017
    %1517 = vmatpush.msra.mxu0 %v1013
    %1518 = vmatpush.msra.mxu0 %v1009
    %1519 = vmatpush.msra.mxu0 %v1005
    %1520 = vmatpush.msra.mxu0 %v1001
    %1521 = vmatmul.f32.gmra.mxu0 %v993
    %v1522 = vpop.f32.mrf.mxu0
    %v1523 = vadd.f32 %v1260, %v1522
    %1524 = vdwg.mxu0
    %1525 = vmatpush.msra.mxu0 %v1125
    %1526 = vmatpush.msra.mxu0 %v1121
    %1527 = vmatpush.msra.mxu0 %v1117
    %1528 = vmatpush.msra.mxu0 %v1113
    %1529 = vmatpush.msra.mxu0 %v1109
    %1530 = vmatpush.msra.mxu0 %v1105
    %1531 = vmatpush.msra.mxu0 %v1101
    %1532 = vmatpush.msra.mxu0 %v1097
    %1533 = vmatpush.msra.mxu0 %v1093
    %1534 = vmatpush.msra.mxu0 %v1089
    %1535 = vmatpush.msra.mxu0 %v1085
    %1536 = vmatpush.msra.mxu0 %v1081
    %1537 = vmatpush.msra.mxu0 %v1077
    %1538 = vmatpush.msra.mxu0 %v1073
    %1539 = vmatpush.msra.mxu0 %v1069
    %1540 = vmatpush.msra.mxu0 %v1065
    %1541 = vmatmul.f32.gmra.mxu0 %v994
    %v1542 = vpop.f32.mrf.mxu0
    %v1543 = vadd.f32 %v1523, %v1542
    %1544 = vdwg.mxu0
    %1545 = vmatpush.msra.mxu0 %v1189
    %1546 = vmatpush.msra.mxu0 %v1185
    %1547 = vmatpush.msra.mxu0 %v1181
    %1548 = vmatpush.msra.mxu0 %v1177
    %1549 = vmatpush.msra.mxu0 %v1173
    %1550 = vmatpush.msra.mxu0 %v1169
    %1551 = vmatpush.msra.mxu0 %v1165
    %1552 = vmatpush.msra.mxu0 %v1161
    %1553 = vmatpush.msra.mxu0 %v1157
    %1554 = vmatpush.msra.mxu0 %v1153
    %1555 = vmatpush.msra.mxu0 %v1149
    %1556 = vmatpush.msra.mxu0 %v1145
    %1557 = vmatpush.msra.mxu0 %v1141
    %1558 = vmatpush.msra.mxu0 %v1137
    %1559 = vmatpush.msra.mxu0 %v1133
    %1560 = vmatpush.msra.mxu0 %v1129
    %1561 = vmatmul.f32.gmra.mxu0 %v995
    %v1562 = vpop.f32.mrf.mxu0
    %v1563 = vadd.f32 %v1543, %v1562
    %1564 = vdwg.mxu0
    %1565 = vmatpush.msra.mxu0 %v1253
    %1566 = vmatpush.msra.mxu0 %v1249
    %1567 = vmatpush.msra.mxu0 %v1245
    %1568 = vmatpush.msra.mxu0 %v1241
    %1569 = vmatpush.msra.mxu0 %v1237
    %1570 = vmatpush.msra.mxu0 %v1233
    %1571 = vmatpush.msra.mxu0 %v1229
    %1572 = vmatpush.msra.mxu0 %v1225
    %1573 = vmatpush.msra.mxu0 %v1221
    %1574 = vmatpush.msra.mxu0 %v1217
    %1575 = vmatpush.msra.mxu0 %v1213
    %1576 = vmatpush.msra.mxu0 %v1209
    %1577 = vmatpush.msra.mxu0 %v1205
    %1578 = vmatpush.msra.mxu0 %v1201
    %1579 = vmatpush.msra.mxu0 %v1197
    %1580 = vmatpush.msra.mxu0 %v1193
    %1581 = vmatmul.f32.gmra.mxu0 %v996
    %v1582 = vpop.f32.mrf.mxu0
    %v1583 = vadd.f32 %v1563, %v1582
    %1584 = vdwg.mxu0
    %v1585 = vmul.f32 %v1343, 0.5
    %v1586 = vmul.f32 %v1423, 0.5
    %v1587 = vmul.f32 %v1503, 0.5
    %v1588 = vmul.f32 %v1583, 0.5
    %v1589 = vmul.f32 %v1343, 0.70710677
    %v1590 = vmul.f32 %v1423, 0.70710677
    %v1591 = vmul.f32 %v1503, 0.70710677
    %v1592 = vmul.f32 %v1583, 0.70710677
    %v1593 = vmul.f32 %v1589, %v1589
    %v1594 = vmin.f32 16.0, %v1593
    %v1595 = vmul.f32 %v1594, 2.1237322e-06
    %v1596 = vadd.f32 %v1595, 0.00028619796
    %v1597 = vmul.f32 %v1594, %v1596
    %v1598 = vadd.f32 %v1597, 0.0036580483
    %v1599 = vmul.f32 %v1594, %v1598
    %v1600 = vadd.f32 %v1599, 0.05243302
    %v1601 = vmul.f32 %v1594, %v1600
    %v1602 = vadd.f32 %v1601, 0.18741608
    %v1603 = vmul.f32 %v1594, %v1602
    %v1604 = vadd.f32 %v1603, 1.1283791
    %v1605 = vmul.f32 %v1589, %v1604
    %v1606 = vmul.f32 %v1594, 3.8918573e-05
    %v1607 = vadd.f32 %v1606, 0.001143296
    %v1608 = vmul.f32 %v1594, %v1607
    %v1609 = vadd.f32 %v1608, 0.014752088
    %v1610 = vmul.f32 %v1594, %v1609
    %v1611 = vadd.f32 %v1610, 0.112945676
    %v1612 = vmul.f32 %v1594, %v1611
    %v1613 = vadd.f32 %v1612, 0.4994258
    %v1614 = vmul.f32 %v1594, %v1613
    %v1615 = vadd.f32 %v1614, 1.0
    %v1616 = vrcp.pop %v1615
    %v1617 = vmul.f32 %v1615, %v1616
    %v1618 = vsub.f32 1.0, %v1617
    %v1619 = vmul.f32 %v1616, %v1618
    %v1620 = vadd.f32 %v1616, %v1619
    %vm1621 = vweird.f32 %v1615
    %vm1622 = vweird.f32 %v1616
    %vm1623 = vmor %vm1621, %vm1622
    %v1624 = vsel %vm1623, %v1616, %v1620
    %v1625 = vand.u32 2147483647, %v1615
    %vm1626 = vcmp.eq.f32.partialorder %v1625, 8.507059e+37
    %v1627 = vand.u32 %v1615, 2147483648
    %v1628 = vor.u32 1.1754944e-38, %v1627
    %v1629 = vsel %vm1626, %v1628, %v1624
    %v1630 = vmul.f32 %v1605, %v1629
    %v1631 = vmin.f32 %v1630, 1.0
    %v1632 = vmax.f32 %v1631, -1.0
    %v1633 = vmul.f32 %v1590, %v1590
    %v1634 = vmin.f32 16.0, %v1633
    %v1635 = vmul.f32 %v1634, 2.1237322e-06
    %v1636 = vadd.f32 %v1635, 0.00028619796
    %v1637 = vmul.f32 %v1634, %v1636
    %v1638 = vadd.f32 %v1637, 0.0036580483
    %v1639 = vmul.f32 %v1634, %v1638
    %v1640 = vadd.f32 %v1639, 0.05243302
    %v1641 = vmul.f32 %v1634, %v1640
    %v1642 = vadd.f32 %v1641, 0.18741608
    %v1643 = vmul.f32 %v1634, %v1642
    %v1644 = vadd.f32 %v1643, 1.1283791
    %v1645 = vmul.f32 %v1590, %v1644
    %v1646 = vmul.f32 %v1634, 3.8918573e-05
    %v1647 = vadd.f32 %v1646, 0.001143296
    %v1648 = vmul.f32 %v1634, %v1647
    %v1649 = vadd.f32 %v1648, 0.014752088
    %v1650 = vmul.f32 %v1634, %v1649
    %v1651 = vadd.f32 %v1650, 0.112945676
    %v1652 = vmul.f32 %v1634, %v1651
    %v1653 = vadd.f32 %v1652, 0.4994258
    %v1654 = vmul.f32 %v1634, %v1653
    %v1655 = vadd.f32 %v1654, 1.0
    %v1656 = vrcp.pop %v1655
    %v1657 = vmul.f32 %v1655, %v1656
    %v1658 = vsub.f32 1.0, %v1657
    %v1659 = vmul.f32 %v1656, %v1658
    %v1660 = vadd.f32 %v1656, %v1659
    %vm1661 = vweird.f32 %v1655
    %vm1662 = vweird.f32 %v1656
    %vm1663 = vmor %vm1661, %vm1662
    %v1664 = vsel %vm1663, %v1656, %v1660
    %v1665 = vand.u32 2147483647, %v1655
    %vm1666 = vcmp.eq.f32.partialorder %v1665, 8.507059e+37
    %v1667 = vand.u32 %v1655, 2147483648
    %v1668 = vor.u32 1.1754944e-38, %v1667
    %v1669 = vsel %vm1666, %v1668, %v1664
    %v1670 = vmul.f32 %v1645, %v1669
    %v1671 = vmin.f32 %v1670, 1.0
    %v1672 = vmax.f32 %v1671, -1.0
    %v1673 = vmul.f32 %v1591, %v1591
    %v1674 = vmin.f32 16.0, %v1673
    %v1675 = vmul.f32 %v1674, 2.1237322e-06
    %v1676 = vadd.f32 %v1675, 0.00028619796
    %v1677 = vmul.f32 %v1674, %v1676
    %v1678 = vadd.f32 %v1677, 0.0036580483
    %v1679 = vmul.f32 %v1674, %v1678
    %v1680 = vadd.f32 %v1679, 0.05243302
    %v1681 = vmul.f32 %v1674, %v1680
    %v1682 = vadd.f32 %v1681, 0.18741608
    %v1683 = vmul.f32 %v1674, %v1682
    %v1684 = vadd.f32 %v1683, 1.1283791
    %v1685 = vmul.f32 %v1591, %v1684
    %v1686 = vmul.f32 %v1674, 3.8918573e-05
    %v1687 = vadd.f32 %v1686, 0.001143296
    %v1688 = vmul.f32 %v1674, %v1687
    %v1689 = vadd.f32 %v1688, 0.014752088
    %v1690 = vmul.f32 %v1674, %v1689
    %v1691 = vadd.f32 %v1690, 0.112945676
    %v1692 = vmul.f32 %v1674, %v1691
    %v1693 = vadd.f32 %v1692, 0.4994258
    %v1694 = vmul.f32 %v1674, %v1693
    %v1695 = vadd.f32 %v1694, 1.0
    %v1696 = vrcp.pop %v1695
    %v1697 = vmul.f32 %v1695, %v1696
    %v1698 = vsub.f32 1.0, %v1697
    %v1699 = vmul.f32 %v1696, %v1698
    %v1700 = vadd.f32 %v1696, %v1699
    %vm1701 = vweird.f32 %v1695
    %vm1702 = vweird.f32 %v1696
    %vm1703 = vmor %vm1701, %vm1702
    %v1704 = vsel %vm1703, %v1696, %v1700
    %v1705 = vand.u32 2147483647, %v1695
    %vm1706 = vcmp.eq.f32.partialorder %v1705, 8.507059e+37
    %v1707 = vand.u32 %v1695, 2147483648
    %v1708 = vor.u32 1.1754944e-38, %v1707
    %v1709 = vsel %vm1706, %v1708, %v1704
    %v1710 = vmul.f32 %v1685, %v1709
    %v1711 = vmin.f32 %v1710, 1.0
    %v1712 = vmax.f32 %v1711, -1.0
    %v1713 = vmul.f32 %v1592, %v1592
    %v1714 = vmin.f32 16.0, %v1713
    %v1715 = vmul.f32 %v1714, 2.1237322e-06
    %v1716 = vadd.f32 %v1715, 0.00028619796
    %v1717 = vmul.f32 %v1714, %v1716
    %v1718 = vadd.f32 %v1717, 0.0036580483
    %v1719 = vmul.f32 %v1714, %v1718
    %v1720 = vadd.f32 %v1719, 0.05243302
    %v1721 = vmul.f32 %v1714, %v1720
    %v1722 = vadd.f32 %v1721, 0.18741608
    %v1723 = vmul.f32 %v1714, %v1722
    %v1724 = vadd.f32 %v1723, 1.1283791
    %v1725 = vmul.f32 %v1592, %v1724
    %v1726 = vmul.f32 %v1714, 3.8918573e-05
    %v1727 = vadd.f32 %v1726, 0.001143296
    %v1728 = vmul.f32 %v1714, %v1727
    %v1729 = vadd.f32 %v1728, 0.014752088
    %v1730 = vmul.f32 %v1714, %v1729
    %v1731 = vadd.f32 %v1730, 0.112945676
    %v1732 = vmul.f32 %v1714, %v1731
    %v1733 = vadd.f32 %v1732, 0.4994258
    %v1734 = vmul.f32 %v1714, %v1733
    %v1735 = vadd.f32 %v1734, 1.0
    %v1736 = vrcp.pop %v1735
    %v1737 = vmul.f32 %v1735, %v1736
    %v1738 = vsub.f32 1.0, %v1737
    %v1739 = vmul.f32 %v1736, %v1738
    %v1740 = vadd.f32 %v1736, %v1739
    %vm1741 = vweird.f32 %v1735
    %vm1742 = vweird.f32 %v1736
    %vm1743 = vmor %vm1741, %vm1742
    %v1744 = vsel %vm1743, %v1736, %v1740
    %v1745 = vand.u32 2147483647, %v1735
    %vm1746 = vcmp.eq.f32.partialorder %v1745, 8.507059e+37
    %v1747 = vand.u32 %v1735, 2147483648
    %v1748 = vor.u32 1.1754944e-38, %v1747
    %v1749 = vsel %vm1746, %v1748, %v1744
    %v1750 = vmul.f32 %v1725, %v1749
    %v1751 = vmin.f32 %v1750, 1.0
    %v1752 = vmax.f32 %v1751, -1.0
    %v1753 = vadd.f32 %v1632, 1.0
    %v1754 = vadd.f32 %v1672, 1.0
    %v1755 = vadd.f32 %v1712, 1.0
    %v1756 = vadd.f32 %v1752, 1.0
    %v1757 = vmul.f32 %v1585, %v1753
    %v1758 = vmul.f32 %v1586, %v1754
    %v1759 = vmul.f32 %v1587, %v1755
    %v1760 = vmul.f32 %v1588, %v1756
    %s1761 = scalar_lea.vmem [#allocation8], 4096
    %v1762 = vld [vmem:[%s1761] sm:$0xff]
    %v1763 = vld [vmem:[%s1761 + $0x8] sm:$0xff]
    %v1764 = vld [vmem:[%s1761 + $0x10] sm:$0xff]
    %v1765 = vld [vmem:[%s1761 + $0x18] sm:$0xff]
    %v1766 = vld [vmem:[%s1761 + $0x20] sm:$0xff]
    %v1767 = vld [vmem:[%s1761 + $0x28] sm:$0xff]
    %v1768 = vld [vmem:[%s1761 + $0x30] sm:$0xff]
    %v1769 = vld [vmem:[%s1761 + $0x38] sm:$0xff]
    %v1770 = vld [vmem:[%s1761 + $0x40] sm:$0xff]
    %v1771 = vld [vmem:[%s1761 + $0x48] sm:$0xff]
    %v1772 = vld [vmem:[%s1761 + $0x50] sm:$0xff]
    %v1773 = vld [vmem:[%s1761 + $0x58] sm:$0xff]
    %v1774 = vld [vmem:[%s1761 + $0x60] sm:$0xff]
    %v1775 = vld [vmem:[%s1761 + $0x68] sm:$0xff]
    %v1776 = vld [vmem:[%s1761 + $0x70] sm:$0xff]
    %v1777 = vld [vmem:[%s1761 + $0x78] sm:$0xff]
    %v1778 = vld [vmem:[%s1761 + $0x80] sm:$0xff]
    %v1779 = vld [vmem:[%s1761 + $0x88] sm:$0xff]
    %v1780 = vld [vmem:[%s1761 + $0x90] sm:$0xff]
    %v1781 = vld [vmem:[%s1761 + $0x98] sm:$0xff]
    %v1782 = vld [vmem:[%s1761 + $0xa0] sm:$0xff]
    %v1783 = vld [vmem:[%s1761 + $0xa8] sm:$0xff]
    %v1784 = vld [vmem:[%s1761 + $0xb0] sm:$0xff]
    %v1785 = vld [vmem:[%s1761 + $0xb8] sm:$0xff]
    %v1786 = vld [vmem:[%s1761 + $0xc0] sm:$0xff]
    %v1787 = vld [vmem:[%s1761 + $0xc8] sm:$0xff]
    %v1788 = vld [vmem:[%s1761 + $0xd0] sm:$0xff]
    %v1789 = vld [vmem:[%s1761 + $0xd8] sm:$0xff]
    %v1790 = vld [vmem:[%s1761 + $0xe0] sm:$0xff]
    %v1791 = vld [vmem:[%s1761 + $0xe8] sm:$0xff]
    %v1792 = vld [vmem:[%s1761 + $0xf0] sm:$0xff]
    %v1793 = vld [vmem:[%s1761 + $0xf8] sm:$0xff]
    %v1794 = vld [vmem:[%s1761 + $0x100] sm:$0xff]
    %v1795 = vld [vmem:[%s1761 + $0x108] sm:$0xff]
    %v1796 = vld [vmem:[%s1761 + $0x110] sm:$0xff]
    %v1797 = vld [vmem:[%s1761 + $0x118] sm:$0xff]
    %v1798 = vld [vmem:[%s1761 + $0x120] sm:$0xff]
    %v1799 = vld [vmem:[%s1761 + $0x128] sm:$0xff]
    %v1800 = vld [vmem:[%s1761 + $0x130] sm:$0xff]
    %v1801 = vld [vmem:[%s1761 + $0x138] sm:$0xff]
    %v1802 = vld [vmem:[%s1761 + $0x140] sm:$0xff]
    %v1803 = vld [vmem:[%s1761 + $0x148] sm:$0xff]
    %v1804 = vld [vmem:[%s1761 + $0x150] sm:$0xff]
    %v1805 = vld [vmem:[%s1761 + $0x158] sm:$0xff]
    %v1806 = vld [vmem:[%s1761 + $0x160] sm:$0xff]
    %v1807 = vld [vmem:[%s1761 + $0x168] sm:$0xff]
    %v1808 = vld [vmem:[%s1761 + $0x170] sm:$0xff]
    %v1809 = vld [vmem:[%s1761 + $0x178] sm:$0xff]
    %v1810 = vld [vmem:[%s1761 + $0x180] sm:$0xff]
    %v1811 = vld [vmem:[%s1761 + $0x188] sm:$0xff]
    %v1812 = vld [vmem:[%s1761 + $0x190] sm:$0xff]
    %v1813 = vld [vmem:[%s1761 + $0x198] sm:$0xff]
    %v1814 = vld [vmem:[%s1761 + $0x1a0] sm:$0xff]
    %v1815 = vld [vmem:[%s1761 + $0x1a8] sm:$0xff]
    %v1816 = vld [vmem:[%s1761 + $0x1b0] sm:$0xff]
    %v1817 = vld [vmem:[%s1761 + $0x1b8] sm:$0xff]
    %v1818 = vld [vmem:[%s1761 + $0x1c0] sm:$0xff]
    %v1819 = vld [vmem:[%s1761 + $0x1c8] sm:$0xff]
    %v1820 = vld [vmem:[%s1761 + $0x1d0] sm:$0xff]
    %v1821 = vld [vmem:[%s1761 + $0x1d8] sm:$0xff]
    %v1822 = vld [vmem:[%s1761 + $0x1e0] sm:$0xff]
    %v1823 = vld [vmem:[%s1761 + $0x1e8] sm:$0xff]
    %v1824 = vld [vmem:[%s1761 + $0x1f0] sm:$0xff]
    %v1825 = vld [vmem:[%s1761 + $0x1f8] sm:$0xff]
    %v1826 = vld [vmem:[%s1761 + $0x200] sm:$0xff]
    %v1827 = vld [vmem:[%s1761 + $0x208] sm:$0xff]
    %v1828 = vld [vmem:[%s1761 + $0x210] sm:$0xff]
    %v1829 = vld [vmem:[%s1761 + $0x218] sm:$0xff]
    %v1830 = vld [vmem:[%s1761 + $0x220] sm:$0xff]
    %v1831 = vld [vmem:[%s1761 + $0x228] sm:$0xff]
    %v1832 = vld [vmem:[%s1761 + $0x230] sm:$0xff]
    %v1833 = vld [vmem:[%s1761 + $0x238] sm:$0xff]
    %v1834 = vld [vmem:[%s1761 + $0x240] sm:$0xff]
    %v1835 = vld [vmem:[%s1761 + $0x248] sm:$0xff]
    %v1836 = vld [vmem:[%s1761 + $0x250] sm:$0xff]
    %v1837 = vld [vmem:[%s1761 + $0x258] sm:$0xff]
    %v1838 = vld [vmem:[%s1761 + $0x260] sm:$0xff]
    %v1839 = vld [vmem:[%s1761 + $0x268] sm:$0xff]
    %v1840 = vld [vmem:[%s1761 + $0x270] sm:$0xff]
    %v1841 = vld [vmem:[%s1761 + $0x278] sm:$0xff]
    %v1842 = vld [vmem:[%s1761 + $0x280] sm:$0xff]
    %v1843 = vld [vmem:[%s1761 + $0x288] sm:$0xff]
    %v1844 = vld [vmem:[%s1761 + $0x290] sm:$0xff]
    %v1845 = vld [vmem:[%s1761 + $0x298] sm:$0xff]
    %v1846 = vld [vmem:[%s1761 + $0x2a0] sm:$0xff]
    %v1847 = vld [vmem:[%s1761 + $0x2a8] sm:$0xff]
    %v1848 = vld [vmem:[%s1761 + $0x2b0] sm:$0xff]
    %v1849 = vld [vmem:[%s1761 + $0x2b8] sm:$0xff]
    %v1850 = vld [vmem:[%s1761 + $0x2c0] sm:$0xff]
    %v1851 = vld [vmem:[%s1761 + $0x2c8] sm:$0xff]
    %v1852 = vld [vmem:[%s1761 + $0x2d0] sm:$0xff]
    %v1853 = vld [vmem:[%s1761 + $0x2d8] sm:$0xff]
    %v1854 = vld [vmem:[%s1761 + $0x2e0] sm:$0xff]
    %v1855 = vld [vmem:[%s1761 + $0x2e8] sm:$0xff]
    %v1856 = vld [vmem:[%s1761 + $0x2f0] sm:$0xff]
    %v1857 = vld [vmem:[%s1761 + $0x2f8] sm:$0xff]
    %v1858 = vld [vmem:[%s1761 + $0x300] sm:$0xff]
    %v1859 = vld [vmem:[%s1761 + $0x308] sm:$0xff]
    %v1860 = vld [vmem:[%s1761 + $0x310] sm:$0xff]
    %v1861 = vld [vmem:[%s1761 + $0x318] sm:$0xff]
    %v1862 = vld [vmem:[%s1761 + $0x320] sm:$0xff]
    %v1863 = vld [vmem:[%s1761 + $0x328] sm:$0xff]
    %v1864 = vld [vmem:[%s1761 + $0x330] sm:$0xff]
    %v1865 = vld [vmem:[%s1761 + $0x338] sm:$0xff]
    %v1866 = vld [vmem:[%s1761 + $0x340] sm:$0xff]
    %v1867 = vld [vmem:[%s1761 + $0x348] sm:$0xff]
    %v1868 = vld [vmem:[%s1761 + $0x350] sm:$0xff]
    %v1869 = vld [vmem:[%s1761 + $0x358] sm:$0xff]
    %v1870 = vld [vmem:[%s1761 + $0x360] sm:$0xff]
    %v1871 = vld [vmem:[%s1761 + $0x368] sm:$0xff]
    %v1872 = vld [vmem:[%s1761 + $0x370] sm:$0xff]
    %v1873 = vld [vmem:[%s1761 + $0x378] sm:$0xff]
    %v1874 = vld [vmem:[%s1761 + $0x380] sm:$0xff]
    %v1875 = vld [vmem:[%s1761 + $0x388] sm:$0xff]
    %v1876 = vld [vmem:[%s1761 + $0x390] sm:$0xff]
    %v1877 = vld [vmem:[%s1761 + $0x398] sm:$0xff]
    %v1878 = vld [vmem:[%s1761 + $0x3a0] sm:$0xff]
    %v1879 = vld [vmem:[%s1761 + $0x3a8] sm:$0xff]
    %v1880 = vld [vmem:[%s1761 + $0x3b0] sm:$0xff]
    %v1881 = vld [vmem:[%s1761 + $0x3b8] sm:$0xff]
    %v1882 = vld [vmem:[%s1761 + $0x3c0] sm:$0xff]
    %v1883 = vld [vmem:[%s1761 + $0x3c8] sm:$0xff]
    %v1884 = vld [vmem:[%s1761 + $0x3d0] sm:$0xff]
    %v1885 = vld [vmem:[%s1761 + $0x3d8] sm:$0xff]
    %v1886 = vld [vmem:[%s1761 + $0x3e0] sm:$0xff]
    %v1887 = vld [vmem:[%s1761 + $0x3e8] sm:$0xff]
    %v1888 = vld [vmem:[%s1761 + $0x3f0] sm:$0xff]
    %v1889 = vld [vmem:[%s1761 + $0x3f8] sm:$0xff]
    %v1890 = vld [vmem:[%s1761 + $0x400] sm:$0xff]
    %v1891 = vld [vmem:[%s1761 + $0x408] sm:$0xff]
    %v1892 = vld [vmem:[%s1761 + $0x410] sm:$0xff]
    %v1893 = vld [vmem:[%s1761 + $0x418] sm:$0xff]
    %v1894 = vld [vmem:[%s1761 + $0x420] sm:$0xff]
    %v1895 = vld [vmem:[%s1761 + $0x428] sm:$0xff]
    %v1896 = vld [vmem:[%s1761 + $0x430] sm:$0xff]
    %v1897 = vld [vmem:[%s1761 + $0x438] sm:$0xff]
    %v1898 = vld [vmem:[%s1761 + $0x440] sm:$0xff]
    %v1899 = vld [vmem:[%s1761 + $0x448] sm:$0xff]
    %v1900 = vld [vmem:[%s1761 + $0x450] sm:$0xff]
    %v1901 = vld [vmem:[%s1761 + $0x458] sm:$0xff]
    %v1902 = vld [vmem:[%s1761 + $0x460] sm:$0xff]
    %v1903 = vld [vmem:[%s1761 + $0x468] sm:$0xff]
    %v1904 = vld [vmem:[%s1761 + $0x470] sm:$0xff]
    %v1905 = vld [vmem:[%s1761 + $0x478] sm:$0xff]
    %v1906 = vld [vmem:[%s1761 + $0x480] sm:$0xff]
    %v1907 = vld [vmem:[%s1761 + $0x488] sm:$0xff]
    %v1908 = vld [vmem:[%s1761 + $0x490] sm:$0xff]
    %v1909 = vld [vmem:[%s1761 + $0x498] sm:$0xff]
    %v1910 = vld [vmem:[%s1761 + $0x4a0] sm:$0xff]
    %v1911 = vld [vmem:[%s1761 + $0x4a8] sm:$0xff]
    %v1912 = vld [vmem:[%s1761 + $0x4b0] sm:$0xff]
    %v1913 = vld [vmem:[%s1761 + $0x4b8] sm:$0xff]
    %v1914 = vld [vmem:[%s1761 + $0x4c0] sm:$0xff]
    %v1915 = vld [vmem:[%s1761 + $0x4c8] sm:$0xff]
    %v1916 = vld [vmem:[%s1761 + $0x4d0] sm:$0xff]
    %v1917 = vld [vmem:[%s1761 + $0x4d8] sm:$0xff]
    %v1918 = vld [vmem:[%s1761 + $0x4e0] sm:$0xff]
    %v1919 = vld [vmem:[%s1761 + $0x4e8] sm:$0xff]
    %v1920 = vld [vmem:[%s1761 + $0x4f0] sm:$0xff]
    %v1921 = vld [vmem:[%s1761 + $0x4f8] sm:$0xff]
    %v1922 = vld [vmem:[%s1761 + $0x500] sm:$0xff]
    %v1923 = vld [vmem:[%s1761 + $0x508] sm:$0xff]
    %v1924 = vld [vmem:[%s1761 + $0x510] sm:$0xff]
    %v1925 = vld [vmem:[%s1761 + $0x518] sm:$0xff]
    %v1926 = vld [vmem:[%s1761 + $0x520] sm:$0xff]
    %v1927 = vld [vmem:[%s1761 + $0x528] sm:$0xff]
    %v1928 = vld [vmem:[%s1761 + $0x530] sm:$0xff]
    %v1929 = vld [vmem:[%s1761 + $0x538] sm:$0xff]
    %v1930 = vld [vmem:[%s1761 + $0x540] sm:$0xff]
    %v1931 = vld [vmem:[%s1761 + $0x548] sm:$0xff]
    %v1932 = vld [vmem:[%s1761 + $0x550] sm:$0xff]
    %v1933 = vld [vmem:[%s1761 + $0x558] sm:$0xff]
    %v1934 = vld [vmem:[%s1761 + $0x560] sm:$0xff]
    %v1935 = vld [vmem:[%s1761 + $0x568] sm:$0xff]
    %v1936 = vld [vmem:[%s1761 + $0x570] sm:$0xff]
    %v1937 = vld [vmem:[%s1761 + $0x578] sm:$0xff]
    %v1938 = vld [vmem:[%s1761 + $0x580] sm:$0xff]
    %v1939 = vld [vmem:[%s1761 + $0x588] sm:$0xff]
    %v1940 = vld [vmem:[%s1761 + $0x590] sm:$0xff]
    %v1941 = vld [vmem:[%s1761 + $0x598] sm:$0xff]
    %v1942 = vld [vmem:[%s1761 + $0x5a0] sm:$0xff]
    %v1943 = vld [vmem:[%s1761 + $0x5a8] sm:$0xff]
    %v1944 = vld [vmem:[%s1761 + $0x5b0] sm:$0xff]
    %v1945 = vld [vmem:[%s1761 + $0x5b8] sm:$0xff]
    %v1946 = vld [vmem:[%s1761 + $0x5c0] sm:$0xff]
    %v1947 = vld [vmem:[%s1761 + $0x5c8] sm:$0xff]
    %v1948 = vld [vmem:[%s1761 + $0x5d0] sm:$0xff]
    %v1949 = vld [vmem:[%s1761 + $0x5d8] sm:$0xff]
    %v1950 = vld [vmem:[%s1761 + $0x5e0] sm:$0xff]
    %v1951 = vld [vmem:[%s1761 + $0x5e8] sm:$0xff]
    %v1952 = vld [vmem:[%s1761 + $0x5f0] sm:$0xff]
    %v1953 = vld [vmem:[%s1761 + $0x5f8] sm:$0xff]
    %v1954 = vld [vmem:[%s1761 + $0x600] sm:$0xff]
    %v1955 = vld [vmem:[%s1761 + $0x608] sm:$0xff]
    %v1956 = vld [vmem:[%s1761 + $0x610] sm:$0xff]
    %v1957 = vld [vmem:[%s1761 + $0x618] sm:$0xff]
    %v1958 = vld [vmem:[%s1761 + $0x620] sm:$0xff]
    %v1959 = vld [vmem:[%s1761 + $0x628] sm:$0xff]
    %v1960 = vld [vmem:[%s1761 + $0x630] sm:$0xff]
    %v1961 = vld [vmem:[%s1761 + $0x638] sm:$0xff]
    %v1962 = vld [vmem:[%s1761 + $0x640] sm:$0xff]
    %v1963 = vld [vmem:[%s1761 + $0x648] sm:$0xff]
    %v1964 = vld [vmem:[%s1761 + $0x650] sm:$0xff]
    %v1965 = vld [vmem:[%s1761 + $0x658] sm:$0xff]
    %v1966 = vld [vmem:[%s1761 + $0x660] sm:$0xff]
    %v1967 = vld [vmem:[%s1761 + $0x668] sm:$0xff]
    %v1968 = vld [vmem:[%s1761 + $0x670] sm:$0xff]
    %v1969 = vld [vmem:[%s1761 + $0x678] sm:$0xff]
    %v1970 = vld [vmem:[%s1761 + $0x680] sm:$0xff]
    %v1971 = vld [vmem:[%s1761 + $0x688] sm:$0xff]
    %v1972 = vld [vmem:[%s1761 + $0x690] sm:$0xff]
    %v1973 = vld [vmem:[%s1761 + $0x698] sm:$0xff]
    %v1974 = vld [vmem:[%s1761 + $0x6a0] sm:$0xff]
    %v1975 = vld [vmem:[%s1761 + $0x6a8] sm:$0xff]
    %v1976 = vld [vmem:[%s1761 + $0x6b0] sm:$0xff]
    %v1977 = vld [vmem:[%s1761 + $0x6b8] sm:$0xff]
    %v1978 = vld [vmem:[%s1761 + $0x6c0] sm:$0xff]
    %v1979 = vld [vmem:[%s1761 + $0x6c8] sm:$0xff]
    %v1980 = vld [vmem:[%s1761 + $0x6d0] sm:$0xff]
    %v1981 = vld [vmem:[%s1761 + $0x6d8] sm:$0xff]
    %v1982 = vld [vmem:[%s1761 + $0x6e0] sm:$0xff]
    %v1983 = vld [vmem:[%s1761 + $0x6e8] sm:$0xff]
    %v1984 = vld [vmem:[%s1761 + $0x6f0] sm:$0xff]
    %v1985 = vld [vmem:[%s1761 + $0x6f8] sm:$0xff]
    %v1986 = vld [vmem:[%s1761 + $0x700] sm:$0xff]
    %v1987 = vld [vmem:[%s1761 + $0x708] sm:$0xff]
    %v1988 = vld [vmem:[%s1761 + $0x710] sm:$0xff]
    %v1989 = vld [vmem:[%s1761 + $0x718] sm:$0xff]
    %v1990 = vld [vmem:[%s1761 + $0x720] sm:$0xff]
    %v1991 = vld [vmem:[%s1761 + $0x728] sm:$0xff]
    %v1992 = vld [vmem:[%s1761 + $0x730] sm:$0xff]
    %v1993 = vld [vmem:[%s1761 + $0x738] sm:$0xff]
    %v1994 = vld [vmem:[%s1761 + $0x740] sm:$0xff]
    %v1995 = vld [vmem:[%s1761 + $0x748] sm:$0xff]
    %v1996 = vld [vmem:[%s1761 + $0x750] sm:$0xff]
    %v1997 = vld [vmem:[%s1761 + $0x758] sm:$0xff]
    %v1998 = vld [vmem:[%s1761 + $0x760] sm:$0xff]
    %v1999 = vld [vmem:[%s1761 + $0x768] sm:$0xff]
    %v2000 = vld [vmem:[%s1761 + $0x770] sm:$0xff]
    %v2001 = vld [vmem:[%s1761 + $0x778] sm:$0xff]
    %v2002 = vld [vmem:[%s1761 + $0x780] sm:$0xff]
    %v2003 = vld [vmem:[%s1761 + $0x788] sm:$0xff]
    %v2004 = vld [vmem:[%s1761 + $0x790] sm:$0xff]
    %v2005 = vld [vmem:[%s1761 + $0x798] sm:$0xff]
    %v2006 = vld [vmem:[%s1761 + $0x7a0] sm:$0xff]
    %v2007 = vld [vmem:[%s1761 + $0x7a8] sm:$0xff]
    %v2008 = vld [vmem:[%s1761 + $0x7b0] sm:$0xff]
    %v2009 = vld [vmem:[%s1761 + $0x7b8] sm:$0xff]
    %v2010 = vld [vmem:[%s1761 + $0x7c0] sm:$0xff]
    %v2011 = vld [vmem:[%s1761 + $0x7c8] sm:$0xff]
    %v2012 = vld [vmem:[%s1761 + $0x7d0] sm:$0xff]
    %v2013 = vld [vmem:[%s1761 + $0x7d8] sm:$0xff]
    %v2014 = vld [vmem:[%s1761 + $0x7e0] sm:$0xff]
    %v2015 = vld [vmem:[%s1761 + $0x7e8] sm:$0xff]
    %v2016 = vld [vmem:[%s1761 + $0x7f0] sm:$0xff]
    %v2017 = vld [vmem:[%s1761 + $0x7f8] sm:$0xff]
    %s2018 = scalar_lea.vmem [#allocation10], 8
    %v2019 = vld [vmem:[%s2018] sm:$0xf]
    %v2021 = vperm.slane %v2019, 0
    %v2022 = vperm.slane %v2019, 1
    %v2023 = vperm.slane %v2019, 2
    %v2024 = vperm.slane %v2019, 3
    %2029 = vmatpush.msra.mxu0 %v1822
    %2030 = vmatpush.msra.mxu0 %v1818
    %2031 = vmatpush.msra.mxu0 %v1814
    %2032 = vmatpush.msra.mxu0 %v1810
    %2033 = vmatpush.msra.mxu0 %v1806
    %2034 = vmatpush.msra.mxu0 %v1802
    %2035 = vmatpush.msra.mxu0 %v1798
    %2036 = vmatpush.msra.mxu0 %v1794
    %2037 = vmatpush.msra.mxu0 %v1790
    %2038 = vmatpush.msra.mxu0 %v1786
    %2039 = vmatpush.msra.mxu0 %v1782
    %2040 = vmatpush.msra.mxu0 %v1778
    %2041 = vmatpush.msra.mxu0 %v1774
    %2042 = vmatpush.msra.mxu0 %v1770
    %2043 = vmatpush.msra.mxu0 %v1766
    %2044 = vmatpush.msra.mxu0 %v1762
    %2045 = vmatmul.f32.gmra.mxu0 %v1757
    %v2046 = vpop.f32.mrf.mxu0
    %v2047 = vadd.f32 %v2021, %v2046
    %2048 = vdwg.mxu0
    %2049 = vmatpush.msra.mxu0 %v1886
    %2050 = vmatpush.msra.mxu0 %v1882
    %2051 = vmatpush.msra.mxu0 %v1878
    %2052 = vmatpush.msra.mxu0 %v1874
    %2053 = vmatpush.msra.mxu0 %v1870
    %2054 = vmatpush.msra.mxu0 %v1866
    %2055 = vmatpush.msra.mxu0 %v1862
    %2056 = vmatpush.msra.mxu0 %v1858
    %2057 = vmatpush.msra.mxu0 %v1854
    %2058 = vmatpush.msra.mxu0 %v1850
    %2059 = vmatpush.msra.mxu0 %v1846
    %2060 = vmatpush.msra.mxu0 %v1842
    %2061 = vmatpush.msra.mxu0 %v1838
    %2062 = vmatpush.msra.mxu0 %v1834
    %2063 = vmatpush.msra.mxu0 %v1830
    %2064 = vmatpush.msra.mxu0 %v1826
    %2065 = vmatmul.f32.gmra.mxu0 %v1758
    %v2066 = vpop.f32.mrf.mxu0
    %v2067 = vadd.f32 %v2047, %v2066
    %2068 = vdwg.mxu0
    %2069 = vmatpush.msra.mxu0 %v1950
    %2070 = vmatpush.msra.mxu0 %v1946
    %2071 = vmatpush.msra.mxu0 %v1942
    %2072 = vmatpush.msra.mxu0 %v1938
    %2073 = vmatpush.msra.mxu0 %v1934
    %2074 = vmatpush.msra.mxu0 %v1930
    %2075 = vmatpush.msra.mxu0 %v1926
    %2076 = vmatpush.msra.mxu0 %v1922
    %2077 = vmatpush.msra.mxu0 %v1918
    %2078 = vmatpush.msra.mxu0 %v1914
    %2079 = vmatpush.msra.mxu0 %v1910
    %2080 = vmatpush.msra.mxu0 %v1906
    %2081 = vmatpush.msra.mxu0 %v1902
    %2082 = vmatpush.msra.mxu0 %v1898
    %2083 = vmatpush.msra.mxu0 %v1894
    %2084 = vmatpush.msra.mxu0 %v1890
    %2085 = vmatmul.f32.gmra.mxu0 %v1759
    %v2086 = vpop.f32.mrf.mxu0
    %v2087 = vadd.f32 %v2067, %v2086
    %2088 = vdwg.mxu0
    %2089 = vmatpush.msra.mxu0 %v2014
    %2090 = vmatpush.msra.mxu0 %v2010
    %2091 = vmatpush.msra.mxu0 %v2006
    %2092 = vmatpush.msra.mxu0 %v2002
    %2093 = vmatpush.msra.mxu0 %v1998
    %2094 = vmatpush.msra.mxu0 %v1994
    %2095 = vmatpush.msra.mxu0 %v1990
    %2096 = vmatpush.msra.mxu0 %v1986
    %2097 = vmatpush.msra.mxu0 %v1982
    %2098 = vmatpush.msra.mxu0 %v1978
    %2099 = vmatpush.msra.mxu0 %v1974
    %2100 = vmatpush.msra.mxu0 %v1970
    %2101 = vmatpush.msra.mxu0 %v1966
    %2102 = vmatpush.msra.mxu0 %v1962
    %2103 = vmatpush.msra.mxu0 %v1958
    %2104 = vmatpush.msra.mxu0 %v1954
    %2105 = vmatmul.f32.gmra.mxu0 %v1760
    %v2106 = vpop.f32.mrf.mxu0
    %v2107 = vadd.f32 %v2087, %v2106
    %2108 = vdwg.mxu0
    %2109 = vmatpush.msra.mxu0 %v1823
    %2110 = vmatpush.msra.mxu0 %v1819
    %2111 = vmatpush.msra.mxu0 %v1815
    %2112 = vmatpush.msra.mxu0 %v1811
    %2113 = vmatpush.msra.mxu0 %v1807
    %2114 = vmatpush.msra.mxu0 %v1803
    %2115 = vmatpush.msra.mxu0 %v1799
    %2116 = vmatpush.msra.mxu0 %v1795
    %2117 = vmatpush.msra.mxu0 %v1791
    %2118 = vmatpush.msra.mxu0 %v1787
    %2119 = vmatpush.msra.mxu0 %v1783
    %2120 = vmatpush.msra.mxu0 %v1779
    %2121 = vmatpush.msra.mxu0 %v1775
    %2122 = vmatpush.msra.mxu0 %v1771
    %2123 = vmatpush.msra.mxu0 %v1767
    %2124 = vmatpush.msra.mxu0 %v1763
    %2125 = vmatmul.f32.gmra.mxu0 %v1757
    %v2126 = vpop.f32.mrf.mxu0
    %v2127 = vadd.f32 %v2022, %v2126
    %2128 = vdwg.mxu0
    %2129 = vmatpush.msra.mxu0 %v1887
    %2130 = vmatpush.msra.mxu0 %v1883
    %2131 = vmatpush.msra.mxu0 %v1879
    %2132 = vmatpush.msra.mxu0 %v1875
    %2133 = vmatpush.msra.mxu0 %v1871
    %2134 = vmatpush.msra.mxu0 %v1867
    %2135 = vmatpush.msra.mxu0 %v1863
    %2136 = vmatpush.msra.mxu0 %v1859
    %2137 = vmatpush.msra.mxu0 %v1855
    %2138 = vmatpush.msra.mxu0 %v1851
    %2139 = vmatpush.msra.mxu0 %v1847
    %2140 = vmatpush.msra.mxu0 %v1843
    %2141 = vmatpush.msra.mxu0 %v1839
    %2142 = vmatpush.msra.mxu0 %v1835
    %2143 = vmatpush.msra.mxu0 %v1831
    %2144 = vmatpush.msra.mxu0 %v1827
    %2145 = vmatmul.f32.gmra.mxu0 %v1758
    %v2146 = vpop.f32.mrf.mxu0
    %v2147 = vadd.f32 %v2127, %v2146
    %2148 = vdwg.mxu0
    %2149 = vmatpush.msra.mxu0 %v1951
    %2150 = vmatpush.msra.mxu0 %v1947
    %2151 = vmatpush.msra.mxu0 %v1943
    %2152 = vmatpush.msra.mxu0 %v1939
    %2153 = vmatpush.msra.mxu0 %v1935
    %2154 = vmatpush.msra.mxu0 %v1931
    %2155 = vmatpush.msra.mxu0 %v1927
    %2156 = vmatpush.msra.mxu0 %v1923
    %2157 = vmatpush.msra.mxu0 %v1919
    %2158 = vmatpush.msra.mxu0 %v1915
    %2159 = vmatpush.msra.mxu0 %v1911
    %2160 = vmatpush.msra.mxu0 %v1907
    %2161 = vmatpush.msra.mxu0 %v1903
    %2162 = vmatpush.msra.mxu0 %v1899
    %2163 = vmatpush.msra.mxu0 %v1895
    %2164 = vmatpush.msra.mxu0 %v1891
    %2165 = vmatmul.f32.gmra.mxu0 %v1759
    %v2166 = vpop.f32.mrf.mxu0
    %v2167 = vadd.f32 %v2147, %v2166
    %2168 = vdwg.mxu0
    %2169 = vmatpush.msra.mxu0 %v2015
    %2170 = vmatpush.msra.mxu0 %v2011
    %2171 = vmatpush.msra.mxu0 %v2007
    %2172 = vmatpush.msra.mxu0 %v2003
    %2173 = vmatpush.msra.mxu0 %v1999
    %2174 = vmatpush.msra.mxu0 %v1995
    %2175 = vmatpush.msra.mxu0 %v1991
    %2176 = vmatpush.msra.mxu0 %v1987
    %2177 = vmatpush.msra.mxu0 %v1983
    %2178 = vmatpush.msra.mxu0 %v1979
    %2179 = vmatpush.msra.mxu0 %v1975
    %2180 = vmatpush.msra.mxu0 %v1971
    %2181 = vmatpush.msra.mxu0 %v1967
    %2182 = vmatpush.msra.mxu0 %v1963
    %2183 = vmatpush.msra.mxu0 %v1959
    %2184 = vmatpush.msra.mxu0 %v1955
    %2185 = vmatmul.f32.gmra.mxu0 %v1760
    %v2186 = vpop.f32.mrf.mxu0
    %v2187 = vadd.f32 %v2167, %v2186
    %2188 = vdwg.mxu0
    %2189 = vmatpush.msra.mxu0 %v1824
    %2190 = vmatpush.msra.mxu0 %v1820
    %2191 = vmatpush.msra.mxu0 %v1816
    %2192 = vmatpush.msra.mxu0 %v1812
    %2193 = vmatpush.msra.mxu0 %v1808
    %2194 = vmatpush.msra.mxu0 %v1804
    %2195 = vmatpush.msra.mxu0 %v1800
    %2196 = vmatpush.msra.mxu0 %v1796
    %2197 = vmatpush.msra.mxu0 %v1792
    %2198 = vmatpush.msra.mxu0 %v1788
    %2199 = vmatpush.msra.mxu0 %v1784
    %2200 = vmatpush.msra.mxu0 %v1780
    %2201 = vmatpush.msra.mxu0 %v1776
    %2202 = vmatpush.msra.mxu0 %v1772
    %2203 = vmatpush.msra.mxu0 %v1768
    %2204 = vmatpush.msra.mxu0 %v1764
    %2205 = vmatmul.f32.gmra.mxu0 %v1757
    %v2206 = vpop.f32.mrf.mxu0
    %v2207 = vadd.f32 %v2023, %v2206
    %2208 = vdwg.mxu0
    %2209 = vmatpush.msra.mxu0 %v1888
    %2210 = vmatpush.msra.mxu0 %v1884
    %2211 = vmatpush.msra.mxu0 %v1880
    %2212 = vmatpush.msra.mxu0 %v1876
    %2213 = vmatpush.msra.mxu0 %v1872
    %2214 = vmatpush.msra.mxu0 %v1868
    %2215 = vmatpush.msra.mxu0 %v1864
    %2216 = vmatpush.msra.mxu0 %v1860
    %2217 = vmatpush.msra.mxu0 %v1856
    %2218 = vmatpush.msra.mxu0 %v1852
    %2219 = vmatpush.msra.mxu0 %v1848
    %2220 = vmatpush.msra.mxu0 %v1844
    %2221 = vmatpush.msra.mxu0 %v1840
    %2222 = vmatpush.msra.mxu0 %v1836
    %2223 = vmatpush.msra.mxu0 %v1832
    %2224 = vmatpush.msra.mxu0 %v1828
    %2225 = vmatmul.f32.gmra.mxu0 %v1758
    %v2226 = vpop.f32.mrf.mxu0
    %v2227 = vadd.f32 %v2207, %v2226
    %2228 = vdwg.mxu0
    %2229 = vmatpush.msra.mxu0 %v1952
    %2230 = vmatpush.msra.mxu0 %v1948
    %2231 = vmatpush.msra.mxu0 %v1944
    %2232 = vmatpush.msra.mxu0 %v1940
    %2233 = vmatpush.msra.mxu0 %v1936
    %2234 = vmatpush.msra.mxu0 %v1932
    %2235 = vmatpush.msra.mxu0 %v1928
    %2236 = vmatpush.msra.mxu0 %v1924
    %2237 = vmatpush.msra.mxu0 %v1920
    %2238 = vmatpush.msra.mxu0 %v1916
    %2239 = vmatpush.msra.mxu0 %v1912
    %2240 = vmatpush.msra.mxu0 %v1908
    %2241 = vmatpush.msra.mxu0 %v1904
    %2242 = vmatpush.msra.mxu0 %v1900
    %2243 = vmatpush.msra.mxu0 %v1896
    %2244 = vmatpush.msra.mxu0 %v1892
    %2245 = vmatmul.f32.gmra.mxu0 %v1759
    %v2246 = vpop.f32.mrf.mxu0
    %v2247 = vadd.f32 %v2227, %v2246
    %2248 = vdwg.mxu0
    %2249 = vmatpush.msra.mxu0 %v2016
    %2250 = vmatpush.msra.mxu0 %v2012
    %2251 = vmatpush.msra.mxu0 %v2008
    %2252 = vmatpush.msra.mxu0 %v2004
    %2253 = vmatpush.msra.mxu0 %v2000
    %2254 = vmatpush.msra.mxu0 %v1996
    %2255 = vmatpush.msra.mxu0 %v1992
    %2256 = vmatpush.msra.mxu0 %v1988
    %2257 = vmatpush.msra.mxu0 %v1984
    %2258 = vmatpush.msra.mxu0 %v1980
    %2259 = vmatpush.msra.mxu0 %v1976
    %2260 = vmatpush.msra.mxu0 %v1972
    %2261 = vmatpush.msra.mxu0 %v1968
    %2262 = vmatpush.msra.mxu0 %v1964
    %2263 = vmatpush.msra.mxu0 %v1960
    %2264 = vmatpush.msra.mxu0 %v1956
    %2265 = vmatmul.f32.gmra.mxu0 %v1760
    %v2266 = vpop.f32.mrf.mxu0
    %v2267 = vadd.f32 %v2247, %v2266
    %2268 = vdwg.mxu0
    %2269 = vmatpush.msra.mxu0 %v1825
    %2270 = vmatpush.msra.mxu0 %v1821
    %2271 = vmatpush.msra.mxu0 %v1817
    %2272 = vmatpush.msra.mxu0 %v1813
    %2273 = vmatpush.msra.mxu0 %v1809
    %2274 = vmatpush.msra.mxu0 %v1805
    %2275 = vmatpush.msra.mxu0 %v1801
    %2276 = vmatpush.msra.mxu0 %v1797
    %2277 = vmatpush.msra.mxu0 %v1793
    %2278 = vmatpush.msra.mxu0 %v1789
    %2279 = vmatpush.msra.mxu0 %v1785
    %2280 = vmatpush.msra.mxu0 %v1781
    %2281 = vmatpush.msra.mxu0 %v1777
    %2282 = vmatpush.msra.mxu0 %v1773
    %2283 = vmatpush.msra.mxu0 %v1769
    %2284 = vmatpush.msra.mxu0 %v1765
    %2285 = vmatmul.f32.gmra.mxu0 %v1757
    %v2286 = vpop.f32.mrf.mxu0
    %v2287 = vadd.f32 %v2024, %v2286
    %2288 = vdwg.mxu0
    %2289 = vmatpush.msra.mxu0 %v1889
    %2290 = vmatpush.msra.mxu0 %v1885
    %2291 = vmatpush.msra.mxu0 %v1881
    %2292 = vmatpush.msra.mxu0 %v1877
    %2293 = vmatpush.msra.mxu0 %v1873
    %2294 = vmatpush.msra.mxu0 %v1869
    %2295 = vmatpush.msra.mxu0 %v1865
    %2296 = vmatpush.msra.mxu0 %v1861
    %2297 = vmatpush.msra.mxu0 %v1857
    %2298 = vmatpush.msra.mxu0 %v1853
    %2299 = vmatpush.msra.mxu0 %v1849
    %2300 = vmatpush.msra.mxu0 %v1845
    %2301 = vmatpush.msra.mxu0 %v1841
    %2302 = vmatpush.msra.mxu0 %v1837
    %2303 = vmatpush.msra.mxu0 %v1833
    %2304 = vmatpush.msra.mxu0 %v1829
    %2305 = vmatmul.f32.gmra.mxu0 %v1758
    %v2306 = vpop.f32.mrf.mxu0
    %v2307 = vadd.f32 %v2287, %v2306
    %2308 = vdwg.mxu0
    %2309 = vmatpush.msra.mxu0 %v1953
    %2310 = vmatpush.msra.mxu0 %v1949
    %2311 = vmatpush.msra.mxu0 %v1945
    %2312 = vmatpush.msra.mxu0 %v1941
    %2313 = vmatpush.msra.mxu0 %v1937
    %2314 = vmatpush.msra.mxu0 %v1933
    %2315 = vmatpush.msra.mxu0 %v1929
    %2316 = vmatpush.msra.mxu0 %v1925
    %2317 = vmatpush.msra.mxu0 %v1921
    %2318 = vmatpush.msra.mxu0 %v1917
    %2319 = vmatpush.msra.mxu0 %v1913
    %2320 = vmatpush.msra.mxu0 %v1909
    %2321 = vmatpush.msra.mxu0 %v1905
    %2322 = vmatpush.msra.mxu0 %v1901
    %2323 = vmatpush.msra.mxu0 %v1897
    %2324 = vmatpush.msra.mxu0 %v1893
    %2325 = vmatmul.f32.gmra.mxu0 %v1759
    %v2326 = vpop.f32.mrf.mxu0
    %v2327 = vadd.f32 %v2307, %v2326
    %2328 = vdwg.mxu0
    %2329 = vmatpush.msra.mxu0 %v2017
    %2330 = vmatpush.msra.mxu0 %v2013
    %2331 = vmatpush.msra.mxu0 %v2009
    %2332 = vmatpush.msra.mxu0 %v2005
    %2333 = vmatpush.msra.mxu0 %v2001
    %2334 = vmatpush.msra.mxu0 %v1997
    %2335 = vmatpush.msra.mxu0 %v1993
    %2336 = vmatpush.msra.mxu0 %v1989
    %2337 = vmatpush.msra.mxu0 %v1985
    %2338 = vmatpush.msra.mxu0 %v1981
    %2339 = vmatpush.msra.mxu0 %v1977
    %2340 = vmatpush.msra.mxu0 %v1973
    %2341 = vmatpush.msra.mxu0 %v1969
    %2342 = vmatpush.msra.mxu0 %v1965
    %2343 = vmatpush.msra.mxu0 %v1961
    %2344 = vmatpush.msra.mxu0 %v1957
    %2345 = vmatmul.f32.gmra.mxu0 %v1760
    %v2346 = vpop.f32.mrf.mxu0
    %v2347 = vadd.f32 %v2327, %v2346
    %2348 = vdwg.mxu0
    %v2349 = vld [vmem:[#allocation11] sm:$0xff]
    %v2350 = vld [vmem:[#allocation11 + $0x8] sm:$0xff]
    %v2351 = vld [vmem:[#allocation11 + $0x10] sm:$0xff]
    %v2352 = vld [vmem:[#allocation11 + $0x18] sm:$0xff]
    %v2353 = vld [vmem:[#allocation11 + $0x20] sm:$0xff]
    %v2354 = vld [vmem:[#allocation11 + $0x28] sm:$0xff]
    %v2355 = vld [vmem:[#allocation11 + $0x30] sm:$0xff]
    %v2356 = vld [vmem:[#allocation11 + $0x38] sm:$0xff]
    %v2357 = vld [vmem:[#allocation11 + $0x40] sm:$0xff]
    %v2358 = vld [vmem:[#allocation11 + $0x48] sm:$0xff]
    %v2359 = vld [vmem:[#allocation11 + $0x50] sm:$0xff]
    %v2360 = vld [vmem:[#allocation11 + $0x58] sm:$0xff]
    %v2361 = vld [vmem:[#allocation11 + $0x60] sm:$0xff]
    %v2362 = vld [vmem:[#allocation11 + $0x68] sm:$0xff]
    %v2363 = vld [vmem:[#allocation11 + $0x70] sm:$0xff]
    %v2364 = vld [vmem:[#allocation11 + $0x78] sm:$0xff]
    %v2365 = vld [vmem:[#allocation11 + $0x80] sm:$0xff]
    %v2366 = vld [vmem:[#allocation11 + $0x88] sm:$0xff]
    %v2367 = vld [vmem:[#allocation11 + $0x90] sm:$0xff]
    %v2368 = vld [vmem:[#allocation11 + $0x98] sm:$0xff]
    %v2369 = vld [vmem:[#allocation11 + $0xa0] sm:$0xff]
    %v2370 = vld [vmem:[#allocation11 + $0xa8] sm:$0xff]
    %v2371 = vld [vmem:[#allocation11 + $0xb0] sm:$0xff]
    %v2372 = vld [vmem:[#allocation11 + $0xb8] sm:$0xff]
    %v2373 = vld [vmem:[#allocation11 + $0xc0] sm:$0xff]
    %v2374 = vld [vmem:[#allocation11 + $0xc8] sm:$0xff]
    %v2375 = vld [vmem:[#allocation11 + $0xd0] sm:$0xff]
    %v2376 = vld [vmem:[#allocation11 + $0xd8] sm:$0xff]
    %v2377 = vld [vmem:[#allocation11 + $0xe0] sm:$0xff]
    %v2378 = vld [vmem:[#allocation11 + $0xe8] sm:$0xff]
    %v2379 = vld [vmem:[#allocation11 + $0xf0] sm:$0xff]
    %v2380 = vld [vmem:[#allocation11 + $0xf8] sm:$0xff]
    %v2381 = vld [vmem:[#allocation11 + $0x100] sm:$0xff]
    %v2382 = vld [vmem:[#allocation11 + $0x108] sm:$0xff]
    %v2383 = vld [vmem:[#allocation11 + $0x110] sm:$0xff]
    %v2384 = vld [vmem:[#allocation11 + $0x118] sm:$0xff]
    %v2385 = vld [vmem:[#allocation11 + $0x120] sm:$0xff]
    %v2386 = vld [vmem:[#allocation11 + $0x128] sm:$0xff]
    %v2387 = vld [vmem:[#allocation11 + $0x130] sm:$0xff]
    %v2388 = vld [vmem:[#allocation11 + $0x138] sm:$0xff]
    %v2389 = vld [vmem:[#allocation11 + $0x140] sm:$0xff]
    %v2390 = vld [vmem:[#allocation11 + $0x148] sm:$0xff]
    %v2391 = vld [vmem:[#allocation11 + $0x150] sm:$0xff]
    %v2392 = vld [vmem:[#allocation11 + $0x158] sm:$0xff]
    %v2393 = vld [vmem:[#allocation11 + $0x160] sm:$0xff]
    %v2394 = vld [vmem:[#allocation11 + $0x168] sm:$0xff]
    %v2395 = vld [vmem:[#allocation11 + $0x170] sm:$0xff]
    %v2396 = vld [vmem:[#allocation11 + $0x178] sm:$0xff]
    %v2397 = vld [vmem:[#allocation11 + $0x180] sm:$0xff]
    %v2398 = vld [vmem:[#allocation11 + $0x188] sm:$0xff]
    %v2399 = vld [vmem:[#allocation11 + $0x190] sm:$0xff]
    %v2400 = vld [vmem:[#allocation11 + $0x198] sm:$0xff]
    %v2401 = vld [vmem:[#allocation11 + $0x1a0] sm:$0xff]
    %v2402 = vld [vmem:[#allocation11 + $0x1a8] sm:$0xff]
    %v2403 = vld [vmem:[#allocation11 + $0x1b0] sm:$0xff]
    %v2404 = vld [vmem:[#allocation11 + $0x1b8] sm:$0xff]
    %v2405 = vld [vmem:[#allocation11 + $0x1c0] sm:$0xff]
    %v2406 = vld [vmem:[#allocation11 + $0x1c8] sm:$0xff]
    %v2407 = vld [vmem:[#allocation11 + $0x1d0] sm:$0xff]
    %v2408 = vld [vmem:[#allocation11 + $0x1d8] sm:$0xff]
    %v2409 = vld [vmem:[#allocation11 + $0x1e0] sm:$0xff]
    %v2410 = vld [vmem:[#allocation11 + $0x1e8] sm:$0xff]
    %v2411 = vld [vmem:[#allocation11 + $0x1f0] sm:$0xff]
    %v2412 = vld [vmem:[#allocation11 + $0x1f8] sm:$0xff]
    %v2413 = vld [vmem:[#allocation13] sm:$0x1]
    %v2415 = vperm.slane %v2413, 0
    %2417 = vmatpush.msra.mxu0 %v2364
    %2418 = vmatpush.msra.mxu0 %v2363
    %2419 = vmatpush.msra.mxu0 %v2362
    %2420 = vmatpush.msra.mxu0 %v2361
    %2421 = vmatpush.msra.mxu0 %v2360
    %2422 = vmatpush.msra.mxu0 %v2359
    %2423 = vmatpush.msra.mxu0 %v2358
    %2424 = vmatpush.msra.mxu0 %v2357
    %2425 = vmatpush.msra.mxu0 %v2356
    %2426 = vmatpush.msra.mxu0 %v2355
    %2427 = vmatpush.msra.mxu0 %v2354
    %2428 = vmatpush.msra.mxu0 %v2353
    %2429 = vmatpush.msra.mxu0 %v2352
    %2430 = vmatpush.msra.mxu0 %v2351
    %2431 = vmatpush.msra.mxu0 %v2350
    %2432 = vmatpush.msra.mxu0 %v2349
    %2433 = vmatmul.f32.gmra.mxu0 %v2107
    %v2434 = vpop.f32.mrf.mxu0
    %v2435 = vadd.f32 %v2415, %v2434
    %2436 = vdwg.mxu0
    %2437 = vmatpush.msra.mxu0 %v2380
    %2438 = vmatpush.msra.mxu0 %v2379
    %2439 = vmatpush.msra.mxu0 %v2378
    %2440 = vmatpush.msra.mxu0 %v2377
    %2441 = vmatpush.msra.mxu0 %v2376
    %2442 = vmatpush.msra.mxu0 %v2375
    %2443 = vmatpush.msra.mxu0 %v2374
    %2444 = vmatpush.msra.mxu0 %v2373
    %2445 = vmatpush.msra.mxu0 %v2372
    %2446 = vmatpush.msra.mxu0 %v2371
    %2447 = vmatpush.msra.mxu0 %v2370
    %2448 = vmatpush.msra.mxu0 %v2369
    %2449 = vmatpush.msra.mxu0 %v2368
    %2450 = vmatpush.msra.mxu0 %v2367
    %2451 = vmatpush.msra.mxu0 %v2366
    %2452 = vmatpush.msra.mxu0 %v2365
    %2453 = vmatmul.f32.gmra.mxu0 %v2187
    %v2454 = vpop.f32.mrf.mxu0
    %v2455 = vadd.f32 %v2435, %v2454
    %2456 = vdwg.mxu0
    %2457 = vmatpush.msra.mxu0 %v2396
    %2458 = vmatpush.msra.mxu0 %v2395
    %2459 = vmatpush.msra.mxu0 %v2394
    %2460 = vmatpush.msra.mxu0 %v2393
    %2461 = vmatpush.msra.mxu0 %v2392
    %2462 = vmatpush.msra.mxu0 %v2391
    %2463 = vmatpush.msra.mxu0 %v2390
    %2464 = vmatpush.msra.mxu0 %v2389
    %2465 = vmatpush.msra.mxu0 %v2388
    %2466 = vmatpush.msra.mxu0 %v2387
    %2467 = vmatpush.msra.mxu0 %v2386
    %2468 = vmatpush.msra.mxu0 %v2385
    %2469 = vmatpush.msra.mxu0 %v2384
    %2470 = vmatpush.msra.mxu0 %v2383
    %2471 = vmatpush.msra.mxu0 %v2382
    %2472 = vmatpush.msra.mxu0 %v2381
    %2473 = vmatmul.f32.gmra.mxu0 %v2267
    %v2474 = vpop.f32.mrf.mxu0
    %v2475 = vadd.f32 %v2455, %v2474
    %2476 = vdwg.mxu0
    %2477 = vmatpush.msra.mxu0 %v2412
    %2478 = vmatpush.msra.mxu0 %v2411
    %2479 = vmatpush.msra.mxu0 %v2410
    %2480 = vmatpush.msra.mxu0 %v2409
    %2481 = vmatpush.msra.mxu0 %v2408
    %2482 = vmatpush.msra.mxu0 %v2407
    %2483 = vmatpush.msra.mxu0 %v2406
    %2484 = vmatpush.msra.mxu0 %v2405
    %2485 = vmatpush.msra.mxu0 %v2404
    %2486 = vmatpush.msra.mxu0 %v2403
    %2487 = vmatpush.msra.mxu0 %v2402
    %2488 = vmatpush.msra.mxu0 %v2401
    %2489 = vmatpush.msra.mxu0 %v2400
    %2490 = vmatpush.msra.mxu0 %v2399
    %2491 = vmatpush.msra.mxu0 %v2398
    %2492 = vmatpush.msra.mxu0 %v2397
    %2493 = vmatmul.f32.gmra.mxu0 %v2347
    %v2494 = vpop.f32.mrf.mxu0
    %v2495 = vadd.f32 %v2475, %v2494
    %2496 = vdwg.mxu0
    %2497 = vst [vmem:[#allocation14] sm:$0xff] %v2495
    // Predicated region
    $region58: #{tpu_custom_call.1} parent=1 // pred_check
      _
    $region59: #{tpu_custom_call.1} parent=1 // pred_check_branch
      %2499 = sbr.rel (0) target = $region61
    $region60: #{tpu_custom_call.1} parent=1 // pred_region
      %2501 = vsyncadd [#allocation4], 96
      %s2502 = sshll.u32 [#allocation14], 4
      %s2503 = int_to_ptr.vmem [resolvable:$true] %s2502
      %s2504 = sshll.u32 %s7, 4
      %s2505 = int_to_ptr.hbm [resolvable:$true] %s2504
      %2510 = dma.vmem_to_hbm [thread:$0]  %s2503, 32, %s2505, [#allocation4], 32, 32, 2
    $region61: #{tpu_custom_call.1} parent=1 // pred_fallthru
      _
    // Predicated region
    $region62: #{tpu_custom_call.1} parent=1 // pred_check
      _
    $region63: #{tpu_custom_call.1} parent=1 // pred_check_branch
      %2512 = sbr.rel (0) target = $region65
    $region64: #{tpu_custom_call.1} parent=1 // pred_region
      %2514 = dma.done [#allocation4], 128
    $region65: #{tpu_custom_call.1} parent=1 // pred_fallthru
      _
    %2515 = vsyncpa [#allocation3], 1
    %2516 = vsyncpa [#allocation6], 1
    %2517 = vsyncpa [#allocation9], 1
    %2518 = vsyncpa [#allocation12], 1
    %2519 = vsyncpa [#allocation4], 1

</llo_original>
